<compile_context>
chip_gen: v7x
topology: tpu7x:2x2x1
jax: 0.10.0
libtpu: 0.0.40
codegen_flags: <defaults>
</compile_context>

<pallas_src>
import numpy as np
import jax
import jax.numpy as jnp
from jax import lax
from jax.experimental import pallas as pl
from jax.experimental.pallas import tpu as pltpu


def _tap_masks(H, W):
    """(9, H*W) float32 validity masks for the 3x3 SAME-padded taps.

    mask[k, h*W + w] == 1  iff  (h + dy, w + dx) is inside the HxW image,
    where (dy, dx) = (k // 3 - 1, k % 3 - 1).
    """
    hh, ww = np.meshgrid(np.arange(H), np.arange(W), indexing="ij")
    rows = []
    for k in range(9):
        dy, dx = k // 3 - 1, k % 3 - 1
        valid = ((hh + dy >= 0) & (hh + dy < H) &
                 (ww + dx >= 0) & (ww + dx < W))
        rows.append(valid.reshape(-1))
    return jnp.asarray(np.stack(rows).astype(np.float32))


def residual_block_sr(x_nchw, w1, b1, w2, b2):
    """Forward of _Residual_Block_SR.

    x_nchw : (N, C, H, W) float32 (PyTorch layout)
    w1, w2 : (Cout, Cin, 3, 3) float32 (PyTorch conv weight layout)
    b1, b2 : (C,) float32
    returns (N, C, H, W) float32
    """
    N, C, H, W = x_nchw.shape
    HW = H * W
    # Lane-aligned halo offset for the flat activation scratch (>= W+1 so every
    # shifted tap window stays in bounds; multiple of 128 so the activation
    # store into the scratch is lane-aligned).
    OFF = ((W + 1 + 127) // 128) * 128

    # Free (metadata-only) reshapes / tiny weight reshuffles in the wrapper.
    x_flat = x_nchw.reshape(N, C, HW)
    # (O, I, 3, 3) -> (O, 3, 3, I) -> (O, 9*I); column order (ky, kx, ci)
    # matches the tap order written into the im2col scratch below.
    w1m = jnp.transpose(w1, (0, 2, 3, 1)).reshape(C, 9 * C)
    w2m = jnp.transpose(w2, (0, 2, 3, 1)).reshape(C, 9 * C)
    b1c = b1.reshape(C, 1)
    b2c = b2.reshape(C, 1)
    masks = _tap_masks(H, W)

    def kernel(x_ref, m_ref, w1_ref, b1_ref, w2_ref, b2_ref,
               out_ref, act_ref, xs_ref):
        # x_ref   : (1, C, HW)   input image, spatial flattened on lanes
        # m_ref   : (9, HW)      tap validity masks
        # w*_ref  : (C, 9C)      im2col weights, b*_ref : (C, 1)
        # out_ref : (1, C, HW)
        # act_ref : (C, 2*OFF+HW) VMEM scratch holding the current activation
        #                         at lane offset OFF (halo regions are never
        #                         used unmasked, so no memset is needed)
        # xs_ref  : (9C, HW)     VMEM im2col scratch (K = 9C for one fat matmul)
        x = x_ref[0]                                        # (C, HW) f32

        def conv3x3(w_ref, b_ref):
            # act_ref[:, OFF:OFF+HW] holds the conv input (flat spatial).
            for k in range(9):
                dy, dx = k // 3 - 1, k % 3 - 1
                d = dy * W + dx
                tap = act_ref[:, OFF + d:OFF + d + HW]       # shifted view
                m = m_ref[k:k + 1, :]                        # (1, HW)
                xs_ref[k * C:(k + 1) * C, :] = jnp.where(m > 0.5, tap, 0.0)
            # Single MXU matmul per conv: (C, 9C) @ (9C, HW) -> (C, HW).
            return jnp.dot(w_ref[...], xs_ref[...],
                           preferred_element_type=jnp.float32) + b_ref[...]

        act_ref[:, OFF:OFF + HW] = x                         # aligned store
        y = conv3x3(w1_ref, b1_ref)
        y = jnp.maximum(y, 0.2 * y)                          # LeakyReLU(0.2)
        act_ref[:, OFF:OFF + HW] = y
        out = conv3x3(w2_ref, b2_ref) + x                    # residual add
        out_ref[0] = out.astype(out_ref.dtype)               # lane-dense store

    out_flat = pl.pallas_call(
        kernel,
        out_shape=jax.ShapeDtypeStruct((N, C, HW), x_nchw.dtype),
        grid=(N,),
        in_specs=[
            pl.BlockSpec((1, C, HW), lambda n: (n, 0, 0)),   # x
            pl.BlockSpec((9, HW), lambda n: (0, 0)),         # tap masks
            pl.BlockSpec((C, 9 * C), lambda n: (0, 0)),      # w1 (im2col)
            pl.BlockSpec((C, 1), lambda n: (0, 0)),          # b1
            pl.BlockSpec((C, 9 * C), lambda n: (0, 0)),      # w2 (im2col)
            pl.BlockSpec((C, 1), lambda n: (0, 0)),          # b2
        ],
        out_specs=pl.BlockSpec((1, C, HW), lambda n: (n, 0, 0)),
        scratch_shapes=[
            pltpu.VMEM((C, 2 * OFF + HW), jnp.float32),      # flat activation
            pltpu.VMEM((9 * C, HW), jnp.float32),            # im2col (K=9C)
        ],
        compiler_params=pltpu.CompilerParams(
            dimension_semantics=("parallel",)),
    )(x_flat, masks, w1m, b1c, w2m, b2c)

    return out_flat.reshape(N, C, H, W)


def _reference_forward(x_nchw, w1, b1, w2, b2):
    """Pure-JAX reference matching the PyTorch module."""
    dn = ('NCHW', 'OIHW', 'NCHW')
    y = lax.conv_general_dilated(x_nchw, w1, (1, 1), 'SAME',
                                 dimension_numbers=dn,
                                 precision=lax.Precision.HIGHEST)
    y = y + b1[None, :, None, None]
    y = jnp.where(y >= 0.0, y, 0.2 * y)                      # LeakyReLU(0.2)
    y = lax.conv_general_dilated(y, w2, (1, 1), 'SAME',
                                 dimension_numbers=dn,
                                 precision=lax.Precision.HIGHEST)
    y = y + b2[None, :, None, None]
    return y + x_nchw


if __name__ == "__main__":
    # Small, deterministic shapes: num_ft = 4, batch = 2, spatial = 16.
    N, C, H, W = 2, 4, 16, 16
    key = jax.random.PRNGKey(0)
    kx, kw1, kb1, kw2, kb2 = jax.random.split(key, 5)

    x = jax.random.normal(kx, (N, C, H, W), jnp.float32)
    w1 = jax.random.normal(kw1, (C, C, 3, 3), jnp.float32) * 0.1
    b1 = jax.random.normal(kb1, (C,), jnp.float32) * 0.1
    w2 = jax.random.normal(kw2, (C, C, 3, 3), jnp.float32) * 0.1
    b2 = jax.random.normal(kb2, (C,), jnp.float32) * 0.1

    out = jax.block_until_ready(residual_block_sr(x, w1, b1, w2, b2))

    ref = _reference_forward(x, w1, b1, w2, b2)
    err = jnp.max(jnp.abs(out - ref))
    assert out.shape == (N, C, H, W)
    assert jnp.allclose(out, ref, atol=1e-3, rtol=1e-3), f"max abs err = {err}"

    print("KERNEL_OK")
</pallas_src>

<mosaic_0001>
module attributes {stable_mosaic.version = 11 : i64} {
  func.func @kernel(%arg0: i32, %arg1: memref<1x4x256xf32, #tpu.memory_space<vmem>>, %arg2: memref<9x256xf32, #tpu.memory_space<vmem>>, %arg3: memref<4x36xf32, #tpu.memory_space<vmem>>, %arg4: memref<4x1xf32, #tpu.memory_space<vmem>>, %arg5: memref<4x36xf32, #tpu.memory_space<vmem>>, %arg6: memref<4x1xf32, #tpu.memory_space<vmem>>, %arg7: memref<1x4x256xf32, #tpu.memory_space<vmem>>, %arg8: memref<4x512xf32, #tpu.memory_space<vmem>>, %arg9: memref<36x256xf32, #tpu.memory_space<vmem>>) attributes {dimension_semantics = [#tpu.dimension_semantics<parallel>], iteration_bounds = array<i64: 2>, scalar_prefetch = 0 : i64, scratch_operands = 2 : i64, tpu.core_type = #tpu.core_type<tc>, window_params = [{transform_indices = @transform_0, window_bounds = array<i64: 1, 4, 256>}, {pipeline_mode = #tpu.pipeline_mode<synchronous>, transform_indices = @transform_1, window_bounds = array<i64: 9, 256>}, {pipeline_mode = #tpu.pipeline_mode<synchronous>, transform_indices = @transform_2, window_bounds = array<i64: 4, 36>}, {pipeline_mode = #tpu.pipeline_mode<synchronous>, transform_indices = @transform_3, window_bounds = array<i64: 4, 1>}, {pipeline_mode = #tpu.pipeline_mode<synchronous>, transform_indices = @transform_4, window_bounds = array<i64: 4, 36>}, {pipeline_mode = #tpu.pipeline_mode<synchronous>, transform_indices = @transform_5, window_bounds = array<i64: 4, 1>}, {transform_indices = @transform_6, window_bounds = array<i64: 1, 4, 256>}]} {
    %c0 = arith.constant 0 : index
    %c0_0 = arith.constant 0 : index
    %c0_1 = arith.constant 0 : index
    %0 = vector.load %arg1[%c0, %c0_0, %c0_1] : memref<1x4x256xf32, #tpu.memory_space<vmem>>, vector<1x4x256xf32>
    %1 = vector.shape_cast %0 : vector<1x4x256xf32> to vector<4x256xf32>
    %c0_2 = arith.constant 0 : index
    %c128 = arith.constant 128 : index
    %2 = vector.load %arg8[%c0_2, %c128] : memref<4x512xf32, #tpu.memory_space<vmem>>, vector<4x256xf32>
    tpu.vector_store %arg8[%c0_2, %c128], %1 {strides = array<i32>} : memref<4x512xf32, #tpu.memory_space<vmem>>, vector<4x256xf32>,
    %c0_3 = arith.constant 0 : index
    %c111 = arith.constant 111 : index
    %3 = vector.load %arg8[%c0_3, %c111] : memref<4x512xf32, #tpu.memory_space<vmem>>, vector<4x256xf32>
    %c0_4 = arith.constant 0 : index
    %c0_5 = arith.constant 0 : index
    %4 = vector.load %arg2[%c0_4, %c0_5] : memref<9x256xf32, #tpu.memory_space<vmem>>, vector<1x256xf32>
    %cst = arith.constant 5.000000e-01 : f32
    %5 = vector.broadcast %cst : f32 to vector<1x256xf32>
    %6 = arith.cmpf ogt, %4, %5 : vector<1x256xf32>
    %cst_6 = arith.constant 0.000000e+00 : f32
    %7 = vector.shape_cast %6 : vector<1x256xi1> to vector<1x256xi1>
    %8 = vector.broadcast %7 : vector<1x256xi1> to vector<4x256xi1>
    %9 = vector.broadcast %cst_6 : f32 to vector<4x256xf32>
    %10 = arith.select %8, %3, %9 : vector<4x256xi1>, vector<4x256xf32>
    %c0_7 = arith.constant 0 : index
    %c0_8 = arith.constant 0 : index
    %11 = vector.load %arg9[%c0_7, %c0_8] : memref<36x256xf32, #tpu.memory_space<vmem>>, vector<4x256xf32>
    tpu.vector_store %arg9[%c0_7, %c0_8], %10 {strides = array<i32>} : memref<36x256xf32, #tpu.memory_space<vmem>>, vector<4x256xf32>,
    %c0_9 = arith.constant 0 : index
    %c112 = arith.constant 112 : index
    %12 = vector.load %arg8[%c0_9, %c112] : memref<4x512xf32, #tpu.memory_space<vmem>>, vector<4x256xf32>
    %c1 = arith.constant 1 : index
    %c0_10 = arith.constant 0 : index
    %13 = vector.load %arg2[%c1, %c0_10] : memref<9x256xf32, #tpu.memory_space<vmem>>, vector<1x256xf32>
    %cst_11 = arith.constant 5.000000e-01 : f32
    %14 = vector.broadcast %cst_11 : f32 to vector<1x256xf32>
    %15 = arith.cmpf ogt, %13, %14 : vector<1x256xf32>
    %cst_12 = arith.constant 0.000000e+00 : f32
    %16 = vector.shape_cast %15 : vector<1x256xi1> to vector<1x256xi1>
    %17 = vector.broadcast %16 : vector<1x256xi1> to vector<4x256xi1>
    %18 = vector.broadcast %cst_12 : f32 to vector<4x256xf32>
    %19 = arith.select %17, %12, %18 : vector<4x256xi1>, vector<4x256xf32>
    %c4 = arith.constant 4 : index
    %c0_13 = arith.constant 0 : index
    %20 = vector.load %arg9[%c4, %c0_13] : memref<36x256xf32, #tpu.memory_space<vmem>>, vector<4x256xf32>
    tpu.vector_store %arg9[%c4, %c0_13], %19 {strides = array<i32>} : memref<36x256xf32, #tpu.memory_space<vmem>>, vector<4x256xf32>,
    %c0_14 = arith.constant 0 : index
    %c113 = arith.constant 113 : index
    %21 = vector.load %arg8[%c0_14, %c113] : memref<4x512xf32, #tpu.memory_space<vmem>>, vector<4x256xf32>
    %c2 = arith.constant 2 : index
    %c0_15 = arith.constant 0 : index
    %22 = vector.load %arg2[%c2, %c0_15] : memref<9x256xf32, #tpu.memory_space<vmem>>, vector<1x256xf32>
    %cst_16 = arith.constant 5.000000e-01 : f32
    %23 = vector.broadcast %cst_16 : f32 to vector<1x256xf32>
    %24 = arith.cmpf ogt, %22, %23 : vector<1x256xf32>
    %cst_17 = arith.constant 0.000000e+00 : f32
    %25 = vector.shape_cast %24 : vector<1x256xi1> to vector<1x256xi1>
    %26 = vector.broadcast %25 : vector<1x256xi1> to vector<4x256xi1>
    %27 = vector.broadcast %cst_17 : f32 to vector<4x256xf32>
    %28 = arith.select %26, %21, %27 : vector<4x256xi1>, vector<4x256xf32>
    %c8 = arith.constant 8 : index
    %c0_18 = arith.constant 0 : index
    %29 = vector.load %arg9[%c8, %c0_18] : memref<36x256xf32, #tpu.memory_space<vmem>>, vector<4x256xf32>
    tpu.vector_store %arg9[%c8, %c0_18], %28 {strides = array<i32>} : memref<36x256xf32, #tpu.memory_space<vmem>>, vector<4x256xf32>,
    %c0_19 = arith.constant 0 : index
    %c127 = arith.constant 127 : index
    %30 = vector.load %arg8[%c0_19, %c127] : memref<4x512xf32, #tpu.memory_space<vmem>>, vector<4x256xf32>
    %c3 = arith.constant 3 : index
    %c0_20 = arith.constant 0 : index
    %31 = vector.load %arg2[%c3, %c0_20] : memref<9x256xf32, #tpu.memory_space<vmem>>, vector<1x256xf32>
    %cst_21 = arith.constant 5.000000e-01 : f32
    %32 = vector.broadcast %cst_21 : f32 to vector<1x256xf32>
    %33 = arith.cmpf ogt, %31, %32 : vector<1x256xf32>
    %cst_22 = arith.constant 0.000000e+00 : f32
    %34 = vector.shape_cast %33 : vector<1x256xi1> to vector<1x256xi1>
    %35 = vector.broadcast %34 : vector<1x256xi1> to vector<4x256xi1>
    %36 = vector.broadcast %cst_22 : f32 to vector<4x256xf32>
    %37 = arith.select %35, %30, %36 : vector<4x256xi1>, vector<4x256xf32>
    %c12 = arith.constant 12 : index
    %c0_23 = arith.constant 0 : index
    %38 = vector.load %arg9[%c12, %c0_23] : memref<36x256xf32, #tpu.memory_space<vmem>>, vector<4x256xf32>
    tpu.vector_store %arg9[%c12, %c0_23], %37 {strides = array<i32>} : memref<36x256xf32, #tpu.memory_space<vmem>>, vector<4x256xf32>,
    %c0_24 = arith.constant 0 : index
    %c128_25 = arith.constant 128 : index
    %39 = vector.load %arg8[%c0_24, %c128_25] : memref<4x512xf32, #tpu.memory_space<vmem>>, vector<4x256xf32>
    %c4_26 = arith.constant 4 : index
    %c0_27 = arith.constant 0 : index
    %40 = vector.load %arg2[%c4_26, %c0_27] : memref<9x256xf32, #tpu.memory_space<vmem>>, vector<1x256xf32>
    %cst_28 = arith.constant 5.000000e-01 : f32
    %41 = vector.broadcast %cst_28 : f32 to vector<1x256xf32>
    %42 = arith.cmpf ogt, %40, %41 : vector<1x256xf32>
    %cst_29 = arith.constant 0.000000e+00 : f32
    %43 = vector.shape_cast %42 : vector<1x256xi1> to vector<1x256xi1>
    %44 = vector.broadcast %43 : vector<1x256xi1> to vector<4x256xi1>
    %45 = vector.broadcast %cst_29 : f32 to vector<4x256xf32>
    %46 = arith.select %44, %39, %45 : vector<4x256xi1>, vector<4x256xf32>
    %c16 = arith.constant 16 : index
    %c0_30 = arith.constant 0 : index
    %47 = vector.load %arg9[%c16, %c0_30] : memref<36x256xf32, #tpu.memory_space<vmem>>, vector<4x256xf32>
    tpu.vector_store %arg9[%c16, %c0_30], %46 {strides = array<i32>} : memref<36x256xf32, #tpu.memory_space<vmem>>, vector<4x256xf32>,
    %c0_31 = arith.constant 0 : index
    %c129 = arith.constant 129 : index
    %48 = vector.load %arg8[%c0_31, %c129] : memref<4x512xf32, #tpu.memory_space<vmem>>, vector<4x256xf32>
    %c5 = arith.constant 5 : index
    %c0_32 = arith.constant 0 : index
    %49 = vector.load %arg2[%c5, %c0_32] : memref<9x256xf32, #tpu.memory_space<vmem>>, vector<1x256xf32>
    %cst_33 = arith.constant 5.000000e-01 : f32
    %50 = vector.broadcast %cst_33 : f32 to vector<1x256xf32>
    %51 = arith.cmpf ogt, %49, %50 : vector<1x256xf32>
    %cst_34 = arith.constant 0.000000e+00 : f32
    %52 = vector.shape_cast %51 : vector<1x256xi1> to vector<1x256xi1>
    %53 = vector.broadcast %52 : vector<1x256xi1> to vector<4x256xi1>
    %54 = vector.broadcast %cst_34 : f32 to vector<4x256xf32>
    %55 = arith.select %53, %48, %54 : vector<4x256xi1>, vector<4x256xf32>
    %c20 = arith.constant 20 : index
    %c0_35 = arith.constant 0 : index
    %56 = vector.load %arg9[%c20, %c0_35] : memref<36x256xf32, #tpu.memory_space<vmem>>, vector<4x256xf32>
    tpu.vector_store %arg9[%c20, %c0_35], %55 {strides = array<i32>} : memref<36x256xf32, #tpu.memory_space<vmem>>, vector<4x256xf32>,
    %c0_36 = arith.constant 0 : index
    %c143 = arith.constant 143 : index
    %57 = vector.load %arg8[%c0_36, %c143] : memref<4x512xf32, #tpu.memory_space<vmem>>, vector<4x256xf32>
    %c6 = arith.constant 6 : index
    %c0_37 = arith.constant 0 : index
    %58 = vector.load %arg2[%c6, %c0_37] : memref<9x256xf32, #tpu.memory_space<vmem>>, vector<1x256xf32>
    %cst_38 = arith.constant 5.000000e-01 : f32
    %59 = vector.broadcast %cst_38 : f32 to vector<1x256xf32>
    %60 = arith.cmpf ogt, %58, %59 : vector<1x256xf32>
    %cst_39 = arith.constant 0.000000e+00 : f32
    %61 = vector.shape_cast %60 : vector<1x256xi1> to vector<1x256xi1>
    %62 = vector.broadcast %61 : vector<1x256xi1> to vector<4x256xi1>
    %63 = vector.broadcast %cst_39 : f32 to vector<4x256xf32>
    %64 = arith.select %62, %57, %63 : vector<4x256xi1>, vector<4x256xf32>
    %c24 = arith.constant 24 : index
    %c0_40 = arith.constant 0 : index
    %65 = vector.load %arg9[%c24, %c0_40] : memref<36x256xf32, #tpu.memory_space<vmem>>, vector<4x256xf32>
    tpu.vector_store %arg9[%c24, %c0_40], %64 {strides = array<i32>} : memref<36x256xf32, #tpu.memory_space<vmem>>, vector<4x256xf32>,
    %c0_41 = arith.constant 0 : index
    %c144 = arith.constant 144 : index
    %66 = vector.load %arg8[%c0_41, %c144] : memref<4x512xf32, #tpu.memory_space<vmem>>, vector<4x256xf32>
    %c7 = arith.constant 7 : index
    %c0_42 = arith.constant 0 : index
    %67 = vector.load %arg2[%c7, %c0_42] : memref<9x256xf32, #tpu.memory_space<vmem>>, vector<1x256xf32>
    %cst_43 = arith.constant 5.000000e-01 : f32
    %68 = vector.broadcast %cst_43 : f32 to vector<1x256xf32>
    %69 = arith.cmpf ogt, %67, %68 : vector<1x256xf32>
    %cst_44 = arith.constant 0.000000e+00 : f32
    %70 = vector.shape_cast %69 : vector<1x256xi1> to vector<1x256xi1>
    %71 = vector.broadcast %70 : vector<1x256xi1> to vector<4x256xi1>
    %72 = vector.broadcast %cst_44 : f32 to vector<4x256xf32>
    %73 = arith.select %71, %66, %72 : vector<4x256xi1>, vector<4x256xf32>
    %c28 = arith.constant 28 : index
    %c0_45 = arith.constant 0 : index
    %74 = vector.load %arg9[%c28, %c0_45] : memref<36x256xf32, #tpu.memory_space<vmem>>, vector<4x256xf32>
    tpu.vector_store %arg9[%c28, %c0_45], %73 {strides = array<i32>} : memref<36x256xf32, #tpu.memory_space<vmem>>, vector<4x256xf32>,
    %c0_46 = arith.constant 0 : index
    %c145 = arith.constant 145 : index
    %75 = vector.load %arg8[%c0_46, %c145] : memref<4x512xf32, #tpu.memory_space<vmem>>, vector<4x256xf32>
    %c8_47 = arith.constant 8 : index
    %c0_48 = arith.constant 0 : index
    %76 = vector.load %arg2[%c8_47, %c0_48] : memref<9x256xf32, #tpu.memory_space<vmem>>, vector<1x256xf32>
    %cst_49 = arith.constant 5.000000e-01 : f32
    %77 = vector.broadcast %cst_49 : f32 to vector<1x256xf32>
    %78 = arith.cmpf ogt, %76, %77 : vector<1x256xf32>
    %cst_50 = arith.constant 0.000000e+00 : f32
    %79 = vector.shape_cast %78 : vector<1x256xi1> to vector<1x256xi1>
    %80 = vector.broadcast %79 : vector<1x256xi1> to vector<4x256xi1>
    %81 = vector.broadcast %cst_50 : f32 to vector<4x256xf32>
    %82 = arith.select %80, %75, %81 : vector<4x256xi1>, vector<4x256xf32>
    %c32 = arith.constant 32 : index
    %c0_51 = arith.constant 0 : index
    %83 = vector.load %arg9[%c32, %c0_51] : memref<36x256xf32, #tpu.memory_space<vmem>>, vector<4x256xf32>
    tpu.vector_store %arg9[%c32, %c0_51], %82 {strides = array<i32>} : memref<36x256xf32, #tpu.memory_space<vmem>>, vector<4x256xf32>,
    %c0_52 = arith.constant 0 : index
    %c0_53 = arith.constant 0 : index
    %84 = vector.load %arg3[%c0_52, %c0_53] : memref<4x36xf32, #tpu.memory_space<vmem>>, vector<4x36xf32>
    %c0_54 = arith.constant 0 : index
    %c0_55 = arith.constant 0 : index
    %85 = vector.load %arg9[%c0_54, %c0_55] : memref<36x256xf32, #tpu.memory_space<vmem>>, vector<36x256xf32>
    %cst_56 = arith.constant dense<0.000000e+00> : vector<4x256xf32>
    %86 = tpu.matmul %84, %85, %cst_56 {dimension_numbers = #tpu.dot_dimension_numbers<[1], [0], [0], [1], [0, 0, 1, 1], [], []>} : vector<4x36xf32>, vector<36x256xf32>, vector<4x256xf32> -> vector<4x256xf32>
    %c0_57 = arith.constant 0 : index
    %c0_58 = arith.constant 0 : index
    %87 = vector.load %arg4[%c0_57, %c0_58] : memref<4x1xf32, #tpu.memory_space<vmem>>, vector<4x1xf32>
    %88 = vector.broadcast %87 : vector<4x1xf32> to vector<4x256xf32>
    %89 = arith.addf %86, %88 : vector<4x256xf32>
    %cst_59 = arith.constant 2.000000e-01 : f32
    %90 = vector.broadcast %cst_59 : f32 to vector<4x256xf32>
    %91 = arith.mulf %90, %89 : vector<4x256xf32>
    %92 = arith.maximumf %89, %91 : vector<4x256xf32>
    %c0_60 = arith.constant 0 : index
    %c128_61 = arith.constant 128 : index
    %93 = vector.load %arg8[%c0_60, %c128_61] : memref<4x512xf32, #tpu.memory_space<vmem>>, vector<4x256xf32>
    tpu.vector_store %arg8[%c0_60, %c128_61], %92 {strides = array<i32>} : memref<4x512xf32, #tpu.memory_space<vmem>>, vector<4x256xf32>,
    %c0_62 = arith.constant 0 : index
    %c111_63 = arith.constant 111 : index
    %94 = vector.load %arg8[%c0_62, %c111_63] : memref<4x512xf32, #tpu.memory_space<vmem>>, vector<4x256xf32>
    %c0_64 = arith.constant 0 : index
    %c0_65 = arith.constant 0 : index
    %95 = vector.load %arg2[%c0_64, %c0_65] : memref<9x256xf32, #tpu.memory_space<vmem>>, vector<1x256xf32>
    %cst_66 = arith.constant 5.000000e-01 : f32
    %96 = vector.broadcast %cst_66 : f32 to vector<1x256xf32>
    %97 = arith.cmpf ogt, %95, %96 : vector<1x256xf32>
    %cst_67 = arith.constant 0.000000e+00 : f32
    %98 = vector.shape_cast %97 : vector<1x256xi1> to vector<1x256xi1>
    %99 = vector.broadcast %98 : vector<1x256xi1> to vector<4x256xi1>
    %100 = vector.broadcast %cst_67 : f32 to vector<4x256xf32>
    %101 = arith.select %99, %94, %100 : vector<4x256xi1>, vector<4x256xf32>
    %c0_68 = arith.constant 0 : index
    %c0_69 = arith.constant 0 : index
    %102 = vector.load %arg9[%c0_68, %c0_69] : memref<36x256xf32, #tpu.memory_space<vmem>>, vector<4x256xf32>
    tpu.vector_store %arg9[%c0_68, %c0_69], %101 {strides = array<i32>} : memref<36x256xf32, #tpu.memory_space<vmem>>, vector<4x256xf32>,
    %c0_70 = arith.constant 0 : index
    %c112_71 = arith.constant 112 : index
    %103 = vector.load %arg8[%c0_70, %c112_71] : memref<4x512xf32, #tpu.memory_space<vmem>>, vector<4x256xf32>
    %c1_72 = arith.constant 1 : index
    %c0_73 = arith.constant 0 : index
    %104 = vector.load %arg2[%c1_72, %c0_73] : memref<9x256xf32, #tpu.memory_space<vmem>>, vector<1x256xf32>
    %cst_74 = arith.constant 5.000000e-01 : f32
    %105 = vector.broadcast %cst_74 : f32 to vector<1x256xf32>
    %106 = arith.cmpf ogt, %104, %105 : vector<1x256xf32>
    %cst_75 = arith.constant 0.000000e+00 : f32
    %107 = vector.shape_cast %106 : vector<1x256xi1> to vector<1x256xi1>
    %108 = vector.broadcast %107 : vector<1x256xi1> to vector<4x256xi1>
    %109 = vector.broadcast %cst_75 : f32 to vector<4x256xf32>
    %110 = arith.select %108, %103, %109 : vector<4x256xi1>, vector<4x256xf32>
    %c4_76 = arith.constant 4 : index
    %c0_77 = arith.constant 0 : index
    %111 = vector.load %arg9[%c4_76, %c0_77] : memref<36x256xf32, #tpu.memory_space<vmem>>, vector<4x256xf32>
    tpu.vector_store %arg9[%c4_76, %c0_77], %110 {strides = array<i32>} : memref<36x256xf32, #tpu.memory_space<vmem>>, vector<4x256xf32>,
    %c0_78 = arith.constant 0 : index
    %c113_79 = arith.constant 113 : index
    %112 = vector.load %arg8[%c0_78, %c113_79] : memref<4x512xf32, #tpu.memory_space<vmem>>, vector<4x256xf32>
    %c2_80 = arith.constant 2 : index
    %c0_81 = arith.constant 0 : index
    %113 = vector.load %arg2[%c2_80, %c0_81] : memref<9x256xf32, #tpu.memory_space<vmem>>, vector<1x256xf32>
    %cst_82 = arith.constant 5.000000e-01 : f32
    %114 = vector.broadcast %cst_82 : f32 to vector<1x256xf32>
    %115 = arith.cmpf ogt, %113, %114 : vector<1x256xf32>
    %cst_83 = arith.constant 0.000000e+00 : f32
    %116 = vector.shape_cast %115 : vector<1x256xi1> to vector<1x256xi1>
    %117 = vector.broadcast %116 : vector<1x256xi1> to vector<4x256xi1>
    %118 = vector.broadcast %cst_83 : f32 to vector<4x256xf32>
    %119 = arith.select %117, %112, %118 : vector<4x256xi1>, vector<4x256xf32>
    %c8_84 = arith.constant 8 : index
    %c0_85 = arith.constant 0 : index
    %120 = vector.load %arg9[%c8_84, %c0_85] : memref<36x256xf32, #tpu.memory_space<vmem>>, vector<4x256xf32>
    tpu.vector_store %arg9[%c8_84, %c0_85], %119 {strides = array<i32>} : memref<36x256xf32, #tpu.memory_space<vmem>>, vector<4x256xf32>,
    %c0_86 = arith.constant 0 : index
    %c127_87 = arith.constant 127 : index
    %121 = vector.load %arg8[%c0_86, %c127_87] : memref<4x512xf32, #tpu.memory_space<vmem>>, vector<4x256xf32>
    %c3_88 = arith.constant 3 : index
    %c0_89 = arith.constant 0 : index
    %122 = vector.load %arg2[%c3_88, %c0_89] : memref<9x256xf32, #tpu.memory_space<vmem>>, vector<1x256xf32>
    %cst_90 = arith.constant 5.000000e-01 : f32
    %123 = vector.broadcast %cst_90 : f32 to vector<1x256xf32>
    %124 = arith.cmpf ogt, %122, %123 : vector<1x256xf32>
    %cst_91 = arith.constant 0.000000e+00 : f32
    %125 = vector.shape_cast %124 : vector<1x256xi1> to vector<1x256xi1>
    %126 = vector.broadcast %125 : vector<1x256xi1> to vector<4x256xi1>
    %127 = vector.broadcast %cst_91 : f32 to vector<4x256xf32>
    %128 = arith.select %126, %121, %127 : vector<4x256xi1>, vector<4x256xf32>
    %c12_92 = arith.constant 12 : index
    %c0_93 = arith.constant 0 : index
    %129 = vector.load %arg9[%c12_92, %c0_93] : memref<36x256xf32, #tpu.memory_space<vmem>>, vector<4x256xf32>
    tpu.vector_store %arg9[%c12_92, %c0_93], %128 {strides = array<i32>} : memref<36x256xf32, #tpu.memory_space<vmem>>, vector<4x256xf32>,
    %c0_94 = arith.constant 0 : index
    %c128_95 = arith.constant 128 : index
    %130 = vector.load %arg8[%c0_94, %c128_95] : memref<4x512xf32, #tpu.memory_space<vmem>>, vector<4x256xf32>
    %c4_96 = arith.constant 4 : index
    %c0_97 = arith.constant 0 : index
    %131 = vector.load %arg2[%c4_96, %c0_97] : memref<9x256xf32, #tpu.memory_space<vmem>>, vector<1x256xf32>
    %cst_98 = arith.constant 5.000000e-01 : f32
    %132 = vector.broadcast %cst_98 : f32 to vector<1x256xf32>
    %133 = arith.cmpf ogt, %131, %132 : vector<1x256xf32>
    %cst_99 = arith.constant 0.000000e+00 : f32
    %134 = vector.shape_cast %133 : vector<1x256xi1> to vector<1x256xi1>
    %135 = vector.broadcast %134 : vector<1x256xi1> to vector<4x256xi1>
    %136 = vector.broadcast %cst_99 : f32 to vector<4x256xf32>
    %137 = arith.select %135, %130, %136 : vector<4x256xi1>, vector<4x256xf32>
    %c16_100 = arith.constant 16 : index
    %c0_101 = arith.constant 0 : index
    %138 = vector.load %arg9[%c16_100, %c0_101] : memref<36x256xf32, #tpu.memory_space<vmem>>, vector<4x256xf32>
    tpu.vector_store %arg9[%c16_100, %c0_101], %137 {strides = array<i32>} : memref<36x256xf32, #tpu.memory_space<vmem>>, vector<4x256xf32>,
    %c0_102 = arith.constant 0 : index
    %c129_103 = arith.constant 129 : index
    %139 = vector.load %arg8[%c0_102, %c129_103] : memref<4x512xf32, #tpu.memory_space<vmem>>, vector<4x256xf32>
    %c5_104 = arith.constant 5 : index
    %c0_105 = arith.constant 0 : index
    %140 = vector.load %arg2[%c5_104, %c0_105] : memref<9x256xf32, #tpu.memory_space<vmem>>, vector<1x256xf32>
    %cst_106 = arith.constant 5.000000e-01 : f32
    %141 = vector.broadcast %cst_106 : f32 to vector<1x256xf32>
    %142 = arith.cmpf ogt, %140, %141 : vector<1x256xf32>
    %cst_107 = arith.constant 0.000000e+00 : f32
    %143 = vector.shape_cast %142 : vector<1x256xi1> to vector<1x256xi1>
    %144 = vector.broadcast %143 : vector<1x256xi1> to vector<4x256xi1>
    %145 = vector.broadcast %cst_107 : f32 to vector<4x256xf32>
    %146 = arith.select %144, %139, %145 : vector<4x256xi1>, vector<4x256xf32>
    %c20_108 = arith.constant 20 : index
    %c0_109 = arith.constant 0 : index
    %147 = vector.load %arg9[%c20_108, %c0_109] : memref<36x256xf32, #tpu.memory_space<vmem>>, vector<4x256xf32>
    tpu.vector_store %arg9[%c20_108, %c0_109], %146 {strides = array<i32>} : memref<36x256xf32, #tpu.memory_space<vmem>>, vector<4x256xf32>,
    %c0_110 = arith.constant 0 : index
    %c143_111 = arith.constant 143 : index
    %148 = vector.load %arg8[%c0_110, %c143_111] : memref<4x512xf32, #tpu.memory_space<vmem>>, vector<4x256xf32>
    %c6_112 = arith.constant 6 : index
    %c0_113 = arith.constant 0 : index
    %149 = vector.load %arg2[%c6_112, %c0_113] : memref<9x256xf32, #tpu.memory_space<vmem>>, vector<1x256xf32>
    %cst_114 = arith.constant 5.000000e-01 : f32
    %150 = vector.broadcast %cst_114 : f32 to vector<1x256xf32>
    %151 = arith.cmpf ogt, %149, %150 : vector<1x256xf32>
    %cst_115 = arith.constant 0.000000e+00 : f32
    %152 = vector.shape_cast %151 : vector<1x256xi1> to vector<1x256xi1>
    %153 = vector.broadcast %152 : vector<1x256xi1> to vector<4x256xi1>
    %154 = vector.broadcast %cst_115 : f32 to vector<4x256xf32>
    %155 = arith.select %153, %148, %154 : vector<4x256xi1>, vector<4x256xf32>
    %c24_116 = arith.constant 24 : index
    %c0_117 = arith.constant 0 : index
    %156 = vector.load %arg9[%c24_116, %c0_117] : memref<36x256xf32, #tpu.memory_space<vmem>>, vector<4x256xf32>
    tpu.vector_store %arg9[%c24_116, %c0_117], %155 {strides = array<i32>} : memref<36x256xf32, #tpu.memory_space<vmem>>, vector<4x256xf32>,
    %c0_118 = arith.constant 0 : index
    %c144_119 = arith.constant 144 : index
    %157 = vector.load %arg8[%c0_118, %c144_119] : memref<4x512xf32, #tpu.memory_space<vmem>>, vector<4x256xf32>
    %c7_120 = arith.constant 7 : index
    %c0_121 = arith.constant 0 : index
    %158 = vector.load %arg2[%c7_120, %c0_121] : memref<9x256xf32, #tpu.memory_space<vmem>>, vector<1x256xf32>
    %cst_122 = arith.constant 5.000000e-01 : f32
    %159 = vector.broadcast %cst_122 : f32 to vector<1x256xf32>
    %160 = arith.cmpf ogt, %158, %159 : vector<1x256xf32>
    %cst_123 = arith.constant 0.000000e+00 : f32
    %161 = vector.shape_cast %160 : vector<1x256xi1> to vector<1x256xi1>
    %162 = vector.broadcast %161 : vector<1x256xi1> to vector<4x256xi1>
    %163 = vector.broadcast %cst_123 : f32 to vector<4x256xf32>
    %164 = arith.select %162, %157, %163 : vector<4x256xi1>, vector<4x256xf32>
    %c28_124 = arith.constant 28 : index
    %c0_125 = arith.constant 0 : index
    %165 = vector.load %arg9[%c28_124, %c0_125] : memref<36x256xf32, #tpu.memory_space<vmem>>, vector<4x256xf32>
    tpu.vector_store %arg9[%c28_124, %c0_125], %164 {strides = array<i32>} : memref<36x256xf32, #tpu.memory_space<vmem>>, vector<4x256xf32>,
    %c0_126 = arith.constant 0 : index
    %c145_127 = arith.constant 145 : index
    %166 = vector.load %arg8[%c0_126, %c145_127] : memref<4x512xf32, #tpu.memory_space<vmem>>, vector<4x256xf32>
    %c8_128 = arith.constant 8 : index
    %c0_129 = arith.constant 0 : index
    %167 = vector.load %arg2[%c8_128, %c0_129] : memref<9x256xf32, #tpu.memory_space<vmem>>, vector<1x256xf32>
    %cst_130 = arith.constant 5.000000e-01 : f32
    %168 = vector.broadcast %cst_130 : f32 to vector<1x256xf32>
    %169 = arith.cmpf ogt, %167, %168 : vector<1x256xf32>
    %cst_131 = arith.constant 0.000000e+00 : f32
    %170 = vector.shape_cast %169 : vector<1x256xi1> to vector<1x256xi1>
    %171 = vector.broadcast %170 : vector<1x256xi1> to vector<4x256xi1>
    %172 = vector.broadcast %cst_131 : f32 to vector<4x256xf32>
    %173 = arith.select %171, %166, %172 : vector<4x256xi1>, vector<4x256xf32>
    %c32_132 = arith.constant 32 : index
    %c0_133 = arith.constant 0 : index
    %174 = vector.load %arg9[%c32_132, %c0_133] : memref<36x256xf32, #tpu.memory_space<vmem>>, vector<4x256xf32>
    tpu.vector_store %arg9[%c32_132, %c0_133], %173 {strides = array<i32>} : memref<36x256xf32, #tpu.memory_space<vmem>>, vector<4x256xf32>,
    %c0_134 = arith.constant 0 : index
    %c0_135 = arith.constant 0 : index
    %175 = vector.load %arg5[%c0_134, %c0_135] : memref<4x36xf32, #tpu.memory_space<vmem>>, vector<4x36xf32>
    %c0_136 = arith.constant 0 : index
    %c0_137 = arith.constant 0 : index
    %176 = vector.load %arg9[%c0_136, %c0_137] : memref<36x256xf32, #tpu.memory_space<vmem>>, vector<36x256xf32>
    %cst_138 = arith.constant dense<0.000000e+00> : vector<4x256xf32>
    %177 = tpu.matmul %175, %176, %cst_138 {dimension_numbers = #tpu.dot_dimension_numbers<[1], [0], [0], [1], [0, 0, 1, 1], [], []>} : vector<4x36xf32>, vector<36x256xf32>, vector<4x256xf32> -> vector<4x256xf32>
    %c0_139 = arith.constant 0 : index
    %c0_140 = arith.constant 0 : index
    %178 = vector.load %arg6[%c0_139, %c0_140] : memref<4x1xf32, #tpu.memory_space<vmem>>, vector<4x1xf32>
    %179 = vector.broadcast %178 : vector<4x1xf32> to vector<4x256xf32>
    %180 = arith.addf %177, %179 : vector<4x256xf32>
    %181 = arith.addf %180, %1 : vector<4x256xf32>
    %c0_141 = arith.constant 0 : index
    %c0_142 = arith.constant 0 : index
    %c0_143 = arith.constant 0 : index
    %182 = vector.load %arg7[%c0_141, %c0_142, %c0_143] : memref<1x4x256xf32, #tpu.memory_space<vmem>>, vector<1x4x256xf32>
    %183 = vector.shape_cast %182 : vector<1x4x256xf32> to vector<4x256xf32>
    %184 = vector.shape_cast %181 : vector<4x256xf32> to vector<1x4x256xf32>
    tpu.vector_store %arg7[%c0_141, %c0_142, %c0_143], %184 {strides = array<i32>} : memref<1x4x256xf32, #tpu.memory_space<vmem>>, vector<1x4x256xf32>,
    return
  }
  func.func @transform_0(%arg0: i32) -> (i32, i32, i32) {
    %c0_i32 = arith.constant 0 : i32
    %c0_i32_0 = arith.constant 0 : i32
    %c0_i32_1 = arith.constant 0 : i32
    return %arg0, %c0_i32, %c0_i32_0 : i32, i32, i32
  }
  func.func @transform_1(%arg0: i32) -> (i32, i32) {
    %c0_i32 = arith.constant 0 : i32
    %c0_i32_0 = arith.constant 0 : i32
    %c0_i32_1 = arith.constant 0 : i32
    return %c0_i32, %c0_i32_0 : i32, i32
  }
  func.func @transform_2(%arg0: i32) -> (i32, i32) {
    %c0_i32 = arith.constant 0 : i32
    %c0_i32_0 = arith.constant 0 : i32
    %c0_i32_1 = arith.constant 0 : i32
    return %c0_i32, %c0_i32_0 : i32, i32
  }
  func.func @transform_3(%arg0: i32) -> (i32, i32) {
    %c0_i32 = arith.constant 0 : i32
    %c0_i32_0 = arith.constant 0 : i32
    %c0_i32_1 = arith.constant 0 : i32
    return %c0_i32, %c0_i32_0 : i32, i32
  }
  func.func @transform_4(%arg0: i32) -> (i32, i32) {
    %c0_i32 = arith.constant 0 : i32
    %c0_i32_0 = arith.constant 0 : i32
    %c0_i32_1 = arith.constant 0 : i32
    return %c0_i32, %c0_i32_0 : i32, i32
  }
  func.func @transform_5(%arg0: i32) -> (i32, i32) {
    %c0_i32 = arith.constant 0 : i32
    %c0_i32_0 = arith.constant 0 : i32
    %c0_i32_1 = arith.constant 0 : i32
    return %c0_i32, %c0_i32_0 : i32, i32
  }
  func.func @transform_6(%arg0: i32) -> (i32, i32, i32) {
    %c0_i32 = arith.constant 0 : i32
    %c0_i32_0 = arith.constant 0 : i32
    %c0_i32_1 = arith.constant 0 : i32
    return %arg0, %c0_i32, %c0_i32_0 : i32, i32, i32
  }
}

</mosaic_0001>

<llo_original>
// kernel: tpu_custom_call.1
$region0: #{tpu_custom_call.1}
  #allocation0 [shape = 'u32[]', space=smem, size = 0x4, offset = 0x4, fixed_abs, tag = 'smem constant byte address 0x4 - core index']
  #allocation1 [shape = 'u32[144,128]{1,0:T(1,128)}', space=vmem, size = 0x12000, scoped, tag = 'internal scratch']
  #allocation2 [shape = 'f32[4,512]{1,0:T(4,128)}', space=vmem, size = 0x2000, scoped, tag = 'scratch operand']
  #allocation3 [shape = 'f32[36,256]{1,0:T(8,128)}', space=vmem, size = 0xa000, scoped, tag = 'scratch operand']
  %s0 = inlined_call_operand.hbm [shape: f32[2,4,256], index: 0, kind: input, shape index: {}]
  %s1 = inlined_call_operand.hbm [shape: f32[9,256], index: 1, kind: input, shape index: {}]
  %s2 = inlined_call_operand.vmem [shape: f32[4,36], index: 2, kind: input, shape index: {}]
  %s3 = inlined_call_operand.vmem [shape: f32[4,1], index: 3, kind: input, shape index: {}]
  %s4 = inlined_call_operand.vmem [shape: f32[4,36], index: 4, kind: input, shape index: {}]
  %s5 = inlined_call_operand.vmem [shape: f32[4,1], index: 5, kind: input, shape index: {}]
  %s6 = inlined_call_operand.hbm [shape: f32[2,4,256], index: 6, kind: output, shape index: {}]
  %s7 = sld [smem:[#allocation0]]
  $region65: #{tpu_custom_call.1} parent=0
    _
  %s9 = ssub.s32 1, %s7
  %s10 = scalar_select 0, %s9, %s7
  $region1: #{tpu_custom_call.1} parent=0
    #allocation4 [shape = 'u8[8192]{0}', space=vmem, size = 0x2000, scoped, tag = 'input window, operand 0']
    #allocation5 [shape = 's32[2]{0}', space=sflag, size = 0x8, scoped, tag = 'scoped memory for tpu_custom_call.1']
    #allocation6 [shape = 's32[2]{0}', space=sflag, size = 0x8, scoped, tag = 'scoped memory for tpu_custom_call.1']
    #allocation7 [shape = 'u8[16384]{0}', space=vmem, size = 0x4000, scoped, tag = 'input window, operand 1, single buffered']
    #allocation8 [shape = 's32[1]{0}', space=sflag, size = 0x4, scoped, tag = 'scoped memory for tpu_custom_call.1']
    #allocation9 [shape = 'u8[8192]{0}', space=vmem, size = 0x2000, scoped, tag = 'output window, operand 0']
    %11 = vsyncpa [#allocation5], 0
    %s12 = scalar_lea.sflag [#allocation5], 1
    %13 = vsyncpa %s12, 0
    %14 = vsyncpa [#allocation8], 0
    %15 = vsyncpa [#allocation6], 0
    %s16 = scalar_lea.sflag [#allocation6], 1
    %17 = vsyncpa %s16, 0
    loop: start=0, step=1, limit=4
    $region2: #{tpu_custom_call.1} parent=1 // loop_pre_header
      _
    $region3: #{tpu_custom_call.1} parent=1 // loop_header
      %s19 = sphi 0, %s23
      %p20 = scmp.ge.s32.totalorder %s19, 4
      %s29 = sphi 0, %s31
      %s32 = sphi 0, %s29
      %s33 = sphi 0, %s32
      %s49 = sphi 0, %s33
      %s53 = sphi 0, %s53
      %s55 = sphi 0, %s53
      %s56 = sphi 0, %s55
      %s70 = sphi 0, %s56
      %s74 = sphi 0, %s74
      %s76 = sphi 0, %s74
      %s77 = sphi 0, %s76
      %s91 = sphi 0, %s77
      %s95 = sphi 0, %s95
      %s97 = sphi 0, %s95
      %s98 = sphi 0, %s97
      %s112 = sphi 0, %s98
      %s116 = sphi 0, %s116
      %s118 = sphi 0, %s116
      %s119 = sphi 0, %s118
      %s133 = sphi 0, %s119
      %s137 = sphi 0, %s137
      %s139 = sphi 0, %s137
      %s140 = sphi 0, %s139
      %s154 = sphi 0, %s140
      %s160 = sphi 0, %s162
      %s163 = sphi 0, %s160
      %s164 = sphi 0, %s163
      %s180 = sphi 0, %s164
    $region4: #{tpu_custom_call.1} parent=1 // loop_header_branch
      %22 = sbr.rel (%p20) target = $region8
    $region5: #{tpu_custom_call.1} parent=1 // loop_body
      %s24 = ssub.s32 %s19, 1
      %s25 = ssub.s32 %s19, 2
      %s26 = sadd.s32 %s19, 1
      %s27 = ssub.s32 %s19, %s26
      %p28 = scmp.eq.s32.totalorder %s27, 0
      %s30 = sadd.s32 %s29, 1
      %s31 = scalar_select %p28, %s29, %s30
      %p34 = pneg %p28
      %p35 = scmp.eq.s32.totalorder %s19, 1
      %p36 = por %p34, %p35
      %p37 = scmp.ne.s32.totalorder %s29, %s32
      %p38 = scmp.eq.s32.totalorder %s19, 0
      %p39 = por %p37, %p38
      %p40 = scmp.ne.s32.totalorder %s29, %s32
      %p41 = scmp.eq.s32.totalorder %s24, 1
      %p42 = por %p40, %p41
      %p43 = scmp.ne.s32.totalorder %s32, %s33
      %p44 = scmp.eq.s32.totalorder %s24, 0
      %p45 = por %p43, %p44
      %p46 = scmp.ne.s32.totalorder %s32, %s33
      %p47 = scmp.eq.s32.totalorder %s25, 1
      %p48 = por %p46, %p47
      %p50 = scmp.ne.s32.totalorder %s33, %s49
      %p51 = scmp.eq.s32.totalorder %s25, 0
      %p52 = por %p50, %p51
      %s54 = sadd.s32 %s53, 1
      %p57 = scmp.eq.s32.totalorder %s19, 1
      %p58 = scmp.ne.s32.totalorder %s53, %s55
      %p59 = scmp.eq.s32.totalorder %s19, 0
      %p60 = por %p58, %p59
      %p61 = scmp.ne.s32.totalorder %s53, %s55
      %p62 = scmp.eq.s32.totalorder %s24, 1
      %p63 = por %p61, %p62
      %p64 = scmp.ne.s32.totalorder %s55, %s56
      %p65 = scmp.eq.s32.totalorder %s24, 0
      %p66 = por %p64, %p65
      %p67 = scmp.ne.s32.totalorder %s55, %s56
      %p68 = scmp.eq.s32.totalorder %s25, 1
      %p69 = por %p67, %p68
      %p71 = scmp.ne.s32.totalorder %s56, %s70
      %p72 = scmp.eq.s32.totalorder %s25, 0
      %p73 = por %p71, %p72
      %s75 = sadd.s32 %s74, 1
      %p78 = scmp.eq.s32.totalorder %s19, 1
      %p79 = scmp.ne.s32.totalorder %s74, %s76
      %p80 = scmp.eq.s32.totalorder %s19, 0
      %p81 = por %p79, %p80
      %p82 = scmp.ne.s32.totalorder %s74, %s76
      %p83 = scmp.eq.s32.totalorder %s24, 1
      %p84 = por %p82, %p83
      %p85 = scmp.ne.s32.totalorder %s76, %s77
      %p86 = scmp.eq.s32.totalorder %s24, 0
      %p87 = por %p85, %p86
      %p88 = scmp.ne.s32.totalorder %s76, %s77
      %p89 = scmp.eq.s32.totalorder %s25, 1
      %p90 = por %p88, %p89
      %p92 = scmp.ne.s32.totalorder %s77, %s91
      %p93 = scmp.eq.s32.totalorder %s25, 0
      %p94 = por %p92, %p93
      %s96 = sadd.s32 %s95, 1
      %p99 = scmp.eq.s32.totalorder %s19, 1
      %p100 = scmp.ne.s32.totalorder %s95, %s97
      %p101 = scmp.eq.s32.totalorder %s19, 0
      %p102 = por %p100, %p101
      %p103 = scmp.ne.s32.totalorder %s95, %s97
      %p104 = scmp.eq.s32.totalorder %s24, 1
      %p105 = por %p103, %p104
      %p106 = scmp.ne.s32.totalorder %s97, %s98
      %p107 = scmp.eq.s32.totalorder %s24, 0
      %p108 = por %p106, %p107
      %p109 = scmp.ne.s32.totalorder %s97, %s98
      %p110 = scmp.eq.s32.totalorder %s25, 1
      %p111 = por %p109, %p110
      %p113 = scmp.ne.s32.totalorder %s98, %s112
      %p114 = scmp.eq.s32.totalorder %s25, 0
      %p115 = por %p113, %p114
      %s117 = sadd.s32 %s116, 1
      %p120 = scmp.eq.s32.totalorder %s19, 1
      %p121 = scmp.ne.s32.totalorder %s116, %s118
      %p122 = scmp.eq.s32.totalorder %s19, 0
      %p123 = por %p121, %p122
      %p124 = scmp.ne.s32.totalorder %s116, %s118
      %p125 = scmp.eq.s32.totalorder %s24, 1
      %p126 = por %p124, %p125
      %p127 = scmp.ne.s32.totalorder %s118, %s119
      %p128 = scmp.eq.s32.totalorder %s24, 0
      %p129 = por %p127, %p128
      %p130 = scmp.ne.s32.totalorder %s118, %s119
      %p131 = scmp.eq.s32.totalorder %s25, 1
      %p132 = por %p130, %p131
      %p134 = scmp.ne.s32.totalorder %s119, %s133
      %p135 = scmp.eq.s32.totalorder %s25, 0
      %p136 = por %p134, %p135
      %s138 = sadd.s32 %s137, 1
      %p141 = scmp.eq.s32.totalorder %s19, 1
      %p142 = scmp.ne.s32.totalorder %s137, %s139
      %p143 = scmp.eq.s32.totalorder %s19, 0
      %p144 = por %p142, %p143
      %p145 = scmp.ne.s32.totalorder %s137, %s139
      %p146 = scmp.eq.s32.totalorder %s24, 1
      %p147 = por %p145, %p146
      %p148 = scmp.ne.s32.totalorder %s139, %s140
      %p149 = scmp.eq.s32.totalorder %s24, 0
      %p150 = por %p148, %p149
      %p151 = scmp.ne.s32.totalorder %s139, %s140
      %p152 = scmp.eq.s32.totalorder %s25, 1
      %p153 = por %p151, %p152
      %p155 = scmp.ne.s32.totalorder %s140, %s154
      %p156 = scmp.eq.s32.totalorder %s25, 0
      %p157 = por %p155, %p156
      %s158 = ssub.s32 %s19, %s26
      %p159 = scmp.eq.s32.totalorder %s158, 0
      %s161 = sadd.s32 %s160, 1
      %s162 = scalar_select %p159, %s160, %s161
      %p165 = pneg %p159
      %p166 = scmp.eq.s32.totalorder %s19, 1
      %p167 = por %p165, %p166
      %p168 = scmp.ne.s32.totalorder %s160, %s163
      %p169 = scmp.eq.s32.totalorder %s19, 0
      %p170 = por %p168, %p169
      %p171 = scmp.ne.s32.totalorder %s160, %s163
      %p172 = scmp.eq.s32.totalorder %s24, 1
      %p173 = por %p171, %p172
      %p174 = scmp.ne.s32.totalorder %s163, %s164
      %p175 = scmp.eq.s32.totalorder %s24, 0
      %p176 = por %p174, %p175
      %p177 = scmp.ne.s32.totalorder %s163, %s164
      %p178 = scmp.eq.s32.totalorder %s25, 1
      %p179 = por %p177, %p178
      %p181 = scmp.ne.s32.totalorder %s164, %s180
      %p182 = scmp.eq.s32.totalorder %s25, 0
      %p183 = por %p181, %p182
      %p184 = scmp.le.s32.totalorder 1, %s19
      %p185 = scmp.lt.s32.totalorder %s19, 3
      %p186 = pnand %p184, %p185
      %p187 = pneg %p186
      // Predicated region
      $region9: #{tpu_custom_call.1} parent=5 // pred_check
        _
      $region10: #{tpu_custom_call.1} parent=5 // pred_check_branch
        %189 = sbr.rel (%p186) target = $region12
      $region11: #{tpu_custom_call.1} parent=5 // pred_region
        %s190 = ssub.s32 %s19, 1
        // Predicated region
        $region13: #{tpu_custom_call.1} parent=11 // pred_check
          %p191 = pneg %p66
        $region14: #{tpu_custom_call.1} parent=11 // pred_check_branch
          %193 = sbr.rel (%p191) target = $region16
        $region15: #{tpu_custom_call.1} parent=11 // pred_region
          %s195 = ssub.s32 512, 512
          %196 = vsyncadd [#allocation8], %s195
          %s197 = sshll.u32 [#allocation7], 4
          %s198 = int_to_ptr.vmem [resolvable:$true] %s197
          %203 = dma.hbm_to_vmem [thread:$0]  %s1, 512, %s198, [#allocation8], 256, 256, 16
        $region16: #{tpu_custom_call.1} parent=11 // pred_fallthru
          _
        // Predicated region
        $region17: #{tpu_custom_call.1} parent=11 // pred_check
          %p204 = pneg %p87
        $region18: #{tpu_custom_call.1} parent=11 // pred_check_branch
          %206 = sbr.rel (%p204) target = $region20
        $region19: #{tpu_custom_call.1} parent=11 // pred_region
          _
        $region20: #{tpu_custom_call.1} parent=11 // pred_fallthru
          _
        // Predicated region
        $region21: #{tpu_custom_call.1} parent=11 // pred_check
          %p207 = pneg %p108
        $region22: #{tpu_custom_call.1} parent=11 // pred_check_branch
          %209 = sbr.rel (%p207) target = $region24
        $region23: #{tpu_custom_call.1} parent=11 // pred_region
          _
        $region24: #{tpu_custom_call.1} parent=11 // pred_fallthru
          _
        // Predicated region
        $region25: #{tpu_custom_call.1} parent=11 // pred_check
          %p210 = pneg %p129
        $region26: #{tpu_custom_call.1} parent=11 // pred_check_branch
          %212 = sbr.rel (%p210) target = $region28
        $region27: #{tpu_custom_call.1} parent=11 // pred_region
          _
        $region28: #{tpu_custom_call.1} parent=11 // pred_fallthru
          _
        // Predicated region
        $region29: #{tpu_custom_call.1} parent=11 // pred_check
          %p213 = pneg %p150
        $region30: #{tpu_custom_call.1} parent=11 // pred_check_branch
          %215 = sbr.rel (%p213) target = $region32
        $region31: #{tpu_custom_call.1} parent=11 // pred_region
          _
        $region32: #{tpu_custom_call.1} parent=11 // pred_fallthru
          _
      $region12: #{tpu_custom_call.1} parent=5 // pred_fallthru
        _
      %p216 = scmp.lt.s32.totalorder %s19, 2
      // Predicated region
      $region33: #{tpu_custom_call.1} parent=5 // pred_check
        %p217 = pneg %p216
      $region34: #{tpu_custom_call.1} parent=5 // pred_check_branch
        %219 = sbr.rel (%p217) target = $region36
      $region35: #{tpu_custom_call.1} parent=5 // pred_region
        // Predicated region
        $region37: #{tpu_custom_call.1} parent=35 // pred_check
          %p220 = pneg %p39
        $region38: #{tpu_custom_call.1} parent=35 // pred_check_branch
          %222 = sbr.rel (%p220) target = $region40
        $region39: #{tpu_custom_call.1} parent=35 // pred_region
          %s223 = sand.u32 %s29, 1
          %s224 = scalar_lea.sflag [#allocation5], %s223
          %s225 = sand.u32 %s29, 1
          %s226 = smul.addr %s225, 8
          %s227 = scalar_lea.vmem [#allocation4], %s226
          %s229 = ssub.s32 128, 128
          %230 = vsyncadd %s224, %s229
          %s231 = smul.addr %s19, 2
          %s232 = smul.addr %s231, 64
          %s233 = scalar_lea.hbm %s0, %s232
          %s235 = sshll.u32 %s227, 4
          %s236 = int_to_ptr.vmem [resolvable:$true] %s235
          %238 = dma.hbm_to_vmem [thread:$0]  %s233, 128, %s236, %s224
        $region40: #{tpu_custom_call.1} parent=35 // pred_fallthru
          _
      $region36: #{tpu_custom_call.1} parent=5 // pred_fallthru
        _
      %p239 = scmp.le.s32.totalorder 1, %s19
      %p240 = scmp.lt.s32.totalorder %s19, 3
      %p241 = pnand %p239, %p240
      %p242 = pneg %p241
      // Predicated region
      $region41: #{tpu_custom_call.1} parent=5 // pred_check
        _
      $region42: #{tpu_custom_call.1} parent=5 // pred_check_branch
        %244 = sbr.rel (%p241) target = $region44
      $region43: #{tpu_custom_call.1} parent=5 // pred_region
        %s245 = ssub.s32 %s19, 1
        %s246 = sand.u32 %s32, 1
        %s247 = scalar_lea.sflag [#allocation5], %s246
        %s248 = sand.u32 %s32, 1
        %s249 = smul.addr %s248, 8
        %s250 = scalar_lea.vmem [#allocation4], %s249
        // Predicated region
        $region45: #{tpu_custom_call.1} parent=43 // pred_check
          %p251 = pneg %p45
        $region46: #{tpu_custom_call.1} parent=43 // pred_check_branch
          %253 = sbr.rel (%p251) target = $region48
        $region47: #{tpu_custom_call.1} parent=43 // pred_region
          %254 = dma.done %s247, 128
        $region48: #{tpu_custom_call.1} parent=43 // pred_fallthru
          _
        // Predicated region
        $region49: #{tpu_custom_call.1} parent=43 // pred_check
          %p255 = pneg %p66
        $region50: #{tpu_custom_call.1} parent=43 // pred_check_branch
          %257 = sbr.rel (%p255) target = $region52
        $region51: #{tpu_custom_call.1} parent=43 // pred_region
          %258 = dma.done [#allocation8], 512
        $region52: #{tpu_custom_call.1} parent=43 // pred_fallthru
          _
        %s259 = sand.u32 %s32, 1
        %s260 = scalar_lea.sflag [#allocation5], %s259
        %s261 = sand.u32 %s32, 1
        %s262 = smul.addr %s261, 8
        %s263 = scalar_lea.vmem [#allocation4], %s262
        %p264 = pneg %p45
        %p265 = pneg %p42
        %p266 = pneg %p66
        %p267 = pneg %p63
        %p268 = pneg %p87
        %p269 = pneg %p84
        %p270 = pneg %p108
        %p271 = pneg %p105
        %p272 = pneg %p129
        %p273 = pneg %p126
        %p274 = pneg %p150
        %p275 = pneg %p147
        %p276 = pneg %p176
        %p277 = pneg %p173
        %s278 = sand.u32 %s163, 1
        %s279 = scalar_lea.sflag [#allocation6], %s278
        %s280 = sand.u32 %s163, 1
        %s281 = smul.addr %s280, 8
        %s282 = scalar_lea.vmem [#allocation9], %s281
        %v283 = vld [vmem:[%s250] sm:$0xff]
        %284 = vst [vmem:[#allocation2 + $0x4] sm:$0xff] %v283
        %v285 = vld [vmem:[#allocation2] sm:$0xff]
        %v286 = vld [vmem:[#allocation2 + $0x8] sm:$0xf]
        %v287 = vld [vmem:[#allocation7] ss:$8 sm:$0x3]
        %vm288 = vcmp.gt.f32.partialorder %v287, 0.5
        %v289 = vsel %vm288, 1, 0
        %v290 = vlaneseq
        %v291 = vshrl.u32 %v290, 7
        %v292 = vsub.s32 0, %v291
        %v293 = vrot.slane %v289, %v292
        %v294 = vlaneseq
        %v295 = vshrl.u32 %v294, 7
        %v296 = vsub.s32 1, %v295
        %v297 = vrot.slane %v289, %v296
        %vm298 = vcmp.eq.s32.totalorder %v293, 1
        %vm299 = vcmp.eq.s32.totalorder %v297, 1
        %v302 = vcombine.high %v285, %v285
        %303 = vrot.lane.b32.xlu0 %v285, 17
        %v304 = vpop.permute.xlu0 %303
        %305 = vrot.lane.b32.xlu0 %v302, 17
        %v306 = vpop.permute.xlu0 %305
        %307 = vrot.lane.b32.xlu0 %v286, 17
        %v308 = vpop.permute.xlu0 %307
        %vm309 = vcmask 138240
        %v310 = vsel %vm309, %v304, %v306
        %v311 = vsel %vm309, %v306, %v308
        %v314 = vsel %vm298, %v310, 0.0
        %v315 = vsel %vm299, %v311, 0.0
        %316 = vst [vmem:[#allocation3] sm:$0xf] %v314
        %317 = vst [vmem:[#allocation3 + $0x8] sm:$0xf] %v315
        %v318 = vld [vmem:[#allocation2] sm:$0xff]
        %v319 = vld [vmem:[#allocation2 + $0x8] sm:$0xf]
        %s320 = scalar_lea.vmem [#allocation7], 1
        %v321 = vld [vmem:[%s320] ss:$8 sm:$0x3]
        %vm322 = vcmp.gt.f32.partialorder %v321, 0.5
        %v323 = vsel %vm322, 1, 0
        %v324 = vlaneseq
        %v325 = vshrl.u32 %v324, 7
        %v326 = vsub.s32 0, %v325
        %v327 = vrot.slane %v323, %v326
        %v328 = vlaneseq
        %v329 = vshrl.u32 %v328, 7
        %v330 = vsub.s32 1, %v329
        %v331 = vrot.slane %v323, %v330
        %vm332 = vcmp.eq.s32.totalorder %v327, 1
        %vm333 = vcmp.eq.s32.totalorder %v331, 1
        %v336 = vcombine.high %v318, %v318
        %337 = vrot.lane.b32.xlu0 %v318, 16
        %v338 = vpop.permute.xlu0 %337
        %339 = vrot.lane.b32.xlu0 %v336, 16
        %v340 = vpop.permute.xlu0 %339
        %341 = vrot.lane.b32.xlu0 %v319, 16
        %v342 = vpop.permute.xlu0 %341
        %vm343 = vcmask 130048
        %v344 = vsel %vm343, %v338, %v340
        %v345 = vsel %vm343, %v340, %v342
        %v348 = vsel %vm332, %v344, 0.0
        %v349 = vsel %vm333, %v345, 0.0
        %v352 = vrot.slane %v348, 4
        %v353 = vrot.slane %v349, 4
        %356 = vst [vmem:[#allocation3] sm:$0xf0] %v352
        %357 = vst [vmem:[#allocation3 + $0x8] sm:$0xf0] %v353
        %v358 = vld [vmem:[#allocation2] sm:$0xff]
        %v359 = vld [vmem:[#allocation2 + $0x8] sm:$0xf]
        %s360 = scalar_lea.vmem [#allocation7], 2
        %v361 = vld [vmem:[%s360] ss:$8 sm:$0x3]
        %vm362 = vcmp.gt.f32.partialorder %v361, 0.5
        %v363 = vsel %vm362, 1, 0
        %v364 = vlaneseq
        %v365 = vshrl.u32 %v364, 7
        %v366 = vsub.s32 0, %v365
        %v367 = vrot.slane %v363, %v366
        %v368 = vlaneseq
        %v369 = vshrl.u32 %v368, 7
        %v370 = vsub.s32 1, %v369
        %v371 = vrot.slane %v363, %v370
        %vm372 = vcmp.eq.s32.totalorder %v367, 1
        %vm373 = vcmp.eq.s32.totalorder %v371, 1
        %v376 = vcombine.high %v358, %v358
        %377 = vrot.lane.b32.xlu0 %v358, 15
        %v378 = vpop.permute.xlu0 %377
        %379 = vrot.lane.b32.xlu0 %v376, 15
        %v380 = vpop.permute.xlu0 %379
        %381 = vrot.lane.b32.xlu0 %v359, 15
        %v382 = vpop.permute.xlu0 %381
        %vm383 = vcmask 121856
        %v384 = vsel %vm383, %v378, %v380
        %v385 = vsel %vm383, %v380, %v382
        %v388 = vsel %vm372, %v384, 0.0
        %v389 = vsel %vm373, %v385, 0.0
        %390 = vst [vmem:[#allocation3 + $0x10] sm:$0xf] %v388
        %391 = vst [vmem:[#allocation3 + $0x18] sm:$0xf] %v389
        %v392 = vld [vmem:[#allocation2] sm:$0xff]
        %v393 = vld [vmem:[#allocation2 + $0x8] sm:$0xf]
        %s394 = scalar_lea.vmem [#allocation7], 3
        %v395 = vld [vmem:[%s394] ss:$8 sm:$0x3]
        %vm396 = vcmp.gt.f32.partialorder %v395, 0.5
        %v397 = vsel %vm396, 1, 0
        %v398 = vlaneseq
        %v399 = vshrl.u32 %v398, 7
        %v400 = vsub.s32 0, %v399
        %v401 = vrot.slane %v397, %v400
        %v402 = vlaneseq
        %v403 = vshrl.u32 %v402, 7
        %v404 = vsub.s32 1, %v403
        %v405 = vrot.slane %v397, %v404
        %vm406 = vcmp.eq.s32.totalorder %v401, 1
        %vm407 = vcmp.eq.s32.totalorder %v405, 1
        %v410 = vcombine.high %v392, %v392
        %411 = vrot.lane.b32.xlu0 %v392, 1
        %v412 = vpop.permute.xlu0 %411
        %413 = vrot.lane.b32.xlu0 %v410, 1
        %v414 = vpop.permute.xlu0 %413
        %415 = vrot.lane.b32.xlu0 %v393, 1
        %v416 = vpop.permute.xlu0 %415
        %vm417 = vcmask 7168
        %v418 = vsel %vm417, %v412, %v414
        %v419 = vsel %vm417, %v414, %v416
        %v422 = vsel %vm406, %v418, 0.0
        %v423 = vsel %vm407, %v419, 0.0
        %v426 = vrot.slane %v422, 4
        %v427 = vrot.slane %v423, 4
        %430 = vst [vmem:[#allocation3 + $0x10] sm:$0xf0] %v426
        %431 = vst [vmem:[#allocation3 + $0x18] sm:$0xf0] %v427
        %v432 = vld [vmem:[#allocation2 + $0x4] sm:$0xff]
        %s433 = scalar_lea.vmem [#allocation7], 4
        %v434 = vld [vmem:[%s433] ss:$8 sm:$0x3]
        %vm435 = vcmp.gt.f32.partialorder %v434, 0.5
        %v436 = vsel %vm435, 1, 0
        %v437 = vlaneseq
        %v438 = vshrl.u32 %v437, 7
        %v439 = vsub.s32 0, %v438
        %v440 = vrot.slane %v436, %v439
        %v441 = vlaneseq
        %v442 = vshrl.u32 %v441, 7
        %v443 = vsub.s32 1, %v442
        %v444 = vrot.slane %v436, %v443
        %vm445 = vcmp.eq.s32.totalorder %v440, 1
        %vm446 = vcmp.eq.s32.totalorder %v444, 1
        %v448 = vcombine.high %v432, %v432
        %v450 = vsel %vm445, %v432, 0.0
        %v451 = vsel %vm446, %v448, 0.0
        %452 = vst [vmem:[#allocation3 + $0x20] sm:$0xf] %v450
        %453 = vst [vmem:[#allocation3 + $0x28] sm:$0xf] %v451
        %v454 = vld [vmem:[#allocation2 + $0x4] sm:$0xff]
        %v455 = vld [vmem:[#allocation2 + $0xc] sm:$0xf]
        %s456 = scalar_lea.vmem [#allocation7], 5
        %v457 = vld [vmem:[%s456] ss:$8 sm:$0x3]
        %vm458 = vcmp.gt.f32.partialorder %v457, 0.5
        %v459 = vsel %vm458, 1, 0
        %v460 = vlaneseq
        %v461 = vshrl.u32 %v460, 7
        %v462 = vsub.s32 0, %v461
        %v463 = vrot.slane %v459, %v462
        %v464 = vlaneseq
        %v465 = vshrl.u32 %v464, 7
        %v466 = vsub.s32 1, %v465
        %v467 = vrot.slane %v459, %v466
        %vm468 = vcmp.eq.s32.totalorder %v463, 1
        %vm469 = vcmp.eq.s32.totalorder %v467, 1
        %v472 = vcombine.high %v454, %v454
        %473 = vrot.lane.b32.xlu0 %v454, 127
        %v474 = vpop.permute.xlu0 %473
        %475 = vrot.lane.b32.xlu0 %v472, 127
        %v476 = vpop.permute.xlu0 %475
        %477 = vrot.lane.b32.xlu0 %v455, 127
        %v478 = vpop.permute.xlu0 %477
        %vm479 = vcmask 1039360
        %v480 = vsel %vm479, %v474, %v476
        %v481 = vsel %vm479, %v476, %v478
        %v484 = vsel %vm468, %v480, 0.0
        %v485 = vsel %vm469, %v481, 0.0
        %v488 = vrot.slane %v484, 4
        %v489 = vrot.slane %v485, 4
        %492 = vst [vmem:[#allocation3 + $0x20] sm:$0xf0] %v488
        %493 = vst [vmem:[#allocation3 + $0x28] sm:$0xf0] %v489
        %v494 = vld [vmem:[#allocation2 + $0x4] sm:$0xff]
        %v495 = vld [vmem:[#allocation2 + $0xc] sm:$0xf]
        %s496 = scalar_lea.vmem [#allocation7], 6
        %v497 = vld [vmem:[%s496] ss:$8 sm:$0x3]
        %vm498 = vcmp.gt.f32.partialorder %v497, 0.5
        %v499 = vsel %vm498, 1, 0
        %v500 = vlaneseq
        %v501 = vshrl.u32 %v500, 7
        %v502 = vsub.s32 0, %v501
        %v503 = vrot.slane %v499, %v502
        %v504 = vlaneseq
        %v505 = vshrl.u32 %v504, 7
        %v506 = vsub.s32 1, %v505
        %v507 = vrot.slane %v499, %v506
        %vm508 = vcmp.eq.s32.totalorder %v503, 1
        %vm509 = vcmp.eq.s32.totalorder %v507, 1
        %v512 = vcombine.high %v494, %v494
        %513 = vrot.lane.b32.xlu0 %v494, 113
        %v514 = vpop.permute.xlu0 %513
        %515 = vrot.lane.b32.xlu0 %v512, 113
        %v516 = vpop.permute.xlu0 %515
        %517 = vrot.lane.b32.xlu0 %v495, 113
        %v518 = vpop.permute.xlu0 %517
        %vm519 = vcmask 924672
        %v520 = vsel %vm519, %v514, %v516
        %v521 = vsel %vm519, %v516, %v518
        %v524 = vsel %vm508, %v520, 0.0
        %v525 = vsel %vm509, %v521, 0.0
        %526 = vst [vmem:[#allocation3 + $0x30] sm:$0xf] %v524
        %527 = vst [vmem:[#allocation3 + $0x38] sm:$0xf] %v525
        %v528 = vld [vmem:[#allocation2 + $0x4] sm:$0xff]
        %v529 = vld [vmem:[#allocation2 + $0xc] sm:$0xf]
        %s530 = scalar_lea.vmem [#allocation7], 7
        %v531 = vld [vmem:[%s530] ss:$8 sm:$0x3]
        %vm532 = vcmp.gt.f32.partialorder %v531, 0.5
        %v533 = vsel %vm532, 1, 0
        %v534 = vlaneseq
        %v535 = vshrl.u32 %v534, 7
        %v536 = vsub.s32 0, %v535
        %v537 = vrot.slane %v533, %v536
        %v538 = vlaneseq
        %v539 = vshrl.u32 %v538, 7
        %v540 = vsub.s32 1, %v539
        %v541 = vrot.slane %v533, %v540
        %vm542 = vcmp.eq.s32.totalorder %v537, 1
        %vm543 = vcmp.eq.s32.totalorder %v541, 1
        %v546 = vcombine.high %v528, %v528
        %547 = vrot.lane.b32.xlu0 %v528, 112
        %v548 = vpop.permute.xlu0 %547
        %549 = vrot.lane.b32.xlu0 %v546, 112
        %v550 = vpop.permute.xlu0 %549
        %551 = vrot.lane.b32.xlu0 %v529, 112
        %v552 = vpop.permute.xlu0 %551
        %vm553 = vcmask 916480
        %v554 = vsel %vm553, %v548, %v550
        %v555 = vsel %vm553, %v550, %v552
        %v558 = vsel %vm542, %v554, 0.0
        %v559 = vsel %vm543, %v555, 0.0
        %v562 = vrot.slane %v558, 4
        %v563 = vrot.slane %v559, 4
        %566 = vst [vmem:[#allocation3 + $0x30] sm:$0xf0] %v562
        %567 = vst [vmem:[#allocation3 + $0x38] sm:$0xf0] %v563
        %v568 = vld [vmem:[#allocation2 + $0x4] sm:$0xff]
        %v569 = vld [vmem:[#allocation2 + $0xc] sm:$0xf]
        %s570 = scalar_lea.vmem [#allocation7], 16
        %v571 = vld [vmem:[%s570] ss:$8 sm:$0x3]
        %vm572 = vcmp.gt.f32.partialorder %v571, 0.5
        %v573 = vsel %vm572, 1, 0
        %v574 = vlaneseq
        %v575 = vshrl.u32 %v574, 7
        %v576 = vsub.s32 0, %v575
        %v577 = vrot.slane %v573, %v576
        %v578 = vlaneseq
        %v579 = vshrl.u32 %v578, 7
        %v580 = vsub.s32 1, %v579
        %v581 = vrot.slane %v573, %v580
        %vm582 = vcmp.eq.s32.totalorder %v577, 1
        %vm583 = vcmp.eq.s32.totalorder %v581, 1
        %v586 = vcombine.high %v568, %v568
        %587 = vrot.lane.b32.xlu0 %v568, 111
        %v588 = vpop.permute.xlu0 %587
        %589 = vrot.lane.b32.xlu0 %v586, 111
        %v590 = vpop.permute.xlu0 %589
        %591 = vrot.lane.b32.xlu0 %v569, 111
        %v592 = vpop.permute.xlu0 %591
        %vm593 = vcmask 908288
        %v594 = vsel %vm593, %v588, %v590
        %v595 = vsel %vm593, %v590, %v592
        %v598 = vsel %vm582, %v594, 0.0
        %v599 = vsel %vm583, %v595, 0.0
        %600 = vst [vmem:[#allocation3 + $0x40] sm:$0xf] %v598
        %601 = vst [vmem:[#allocation3 + $0x48] sm:$0xf] %v599
        %v602 = vld [vmem:[%s2] sm:$0xf]
        %v603 = vld [vmem:[#allocation3] sm:$0xff]
        %v604 = vld [vmem:[#allocation3 + $0x8] sm:$0xff]
        %v605 = vld [vmem:[#allocation3 + $0x10] sm:$0xff]
        %v606 = vld [vmem:[#allocation3 + $0x18] sm:$0xff]
        %v607 = vld [vmem:[#allocation3 + $0x20] sm:$0xff]
        %v608 = vld [vmem:[#allocation3 + $0x28] sm:$0xff]
        %v609 = vld [vmem:[#allocation3 + $0x30] sm:$0xff]
        %v610 = vld [vmem:[#allocation3 + $0x38] sm:$0xff]
        %v611 = vld [vmem:[#allocation3 + $0x40] sm:$0xf]
        %v612 = vld [vmem:[#allocation3 + $0x48] sm:$0xf]
        %v613 = vld [vmem:[%s3] sm:$0xf]
        %615 = vset.pattern.permute.xlu0 0
        %616 = vperm.xlu0 %615, %v613
        %v617 = vpop.permute.xlu0 %616
        %vm619 = vcmask 293888
        %v621 = vsel %vm619, %v602, 0
        %vm623 = vcmask 1043456
        %v625 = vsel %vm623, %v611, 0
        %v628 = vsel %vm623, %v612, 0
        %630 = vmatprep.subr.mxu0 %v604
        %631 = vmatpush1.msra.mxu0 %v603
        %632 = vmatprep.subr.mxu0 %v606
        %633 = vmatpush1.msra.mxu0 %v605
        %634 = vmatprep.subr.mxu0 %v608
        %635 = vmatpush1.msra.mxu0 %v607
        %636 = vmatprep.subr.mxu0 %v610
        %637 = vmatpush1.msra.mxu0 %v609
        %638 = vmatprep.subr.mxu0 %v628
        %639 = vmatpush1.msra.mxu0 %v625
        %640 = vmatprep.subr.mxu0 0.0
        %641 = vmatpush1.msra.mxu0 0.0
        %642 = vmatprep.subr.mxu0 0.0
        %643 = vmatpush1.msra.mxu0 0.0
        %644 = vmatprep.subr.mxu0 0.0
        %645 = vmatpush1.msra.mxu0 0.0
        %646 = vmatprep.subr.mxu0 0.0
        %647 = vmatpush1.msra.mxu0 0.0
        %648 = vmatprep.subr.mxu0 0.0
        %649 = vmatpush1.msra.mxu0 0.0
        %650 = vmatprep.subr.mxu0 0.0
        %651 = vmatpush1.msra.mxu0 0.0
        %652 = vmatprep.subr.mxu0 0.0
        %653 = vmatpush1.msra.mxu0 0.0
        %654 = vmatprep.subr.mxu0 0.0
        %655 = vmatpush1.msra.mxu0 0.0
        %656 = vmatprep.subr.mxu0 0.0
        %657 = vmatpush1.msra.mxu0 0.0
        %658 = vmatprep.subr.mxu0 0.0
        %659 = vmatpush1.msra.mxu0 0.0
        %660 = vmatprep.subr.mxu0 0.0
        %661 = vmatpush1.msra.mxu0 0.0
        %662 = vmatprep.subr.mxu0 0.0
        %663 = vmatpush1.msra.mxu0 0.0
        %664 = vmatprep.subr.mxu0 0.0
        %665 = vmatpush1.msra.mxu0 0.0
        %666 = vmatprep.subr.mxu0 0.0
        %667 = vmatpush1.msra.mxu0 0.0
        %668 = vmatprep.subr.mxu0 0.0
        %669 = vmatpush1.msra.mxu0 0.0
        %670 = vmatprep.subr.mxu0 0.0
        %671 = vmatpush1.msra.mxu0 0.0
        %672 = vmatprep.subr.mxu0 0.0
        %673 = vmatpush1.msra.mxu0 0.0
        %674 = vmatprep.subr.mxu0 0.0
        %675 = vmatpush1.msra.mxu0 0.0
        %676 = vmatprep.subr.mxu0 0.0
        %677 = vmatpush1.msra.mxu0 0.0
        %678 = vmatprep.subr.mxu0 0.0
        %679 = vmatpush1.msra.mxu0 0.0
        %680 = vmatprep.subr.mxu0 0.0
        %681 = vmatpush1.msra.mxu0 0.0
        %682 = vmatprep.subr.mxu0 0.0
        %683 = vmatpush1.msra.mxu0 0.0
        %684 = vmatprep.subr.mxu0 0.0
        %685 = vmatpush1.msra.mxu0 0.0
        %686 = vmatprep.subr.mxu0 0.0
        %687 = vmatpush1.msra.mxu0 0.0
        %688 = vmatprep.subr.mxu0 0.0
        %689 = vmatpush1.msra.mxu0 0.0
        %690 = vmatprep.subr.mxu0 0.0
        %691 = vmatpush1.msra.mxu0 0.0
        %692 = vmatprep.subr.mxu0 0.0
        %693 = vmatpush1.msra.mxu0 0.0
        %694 = vmatprep.mubr.f32.mxu0 0.0
        %695 = vmatmul.mubr.f32.gmra.mrb[0].mxu0 %v621
        %v696 = vpop.f32.mrb[0].mxu0
        %v697 = vadd.f32 %v617, %v696
        %v698 = vpop.f32.mrb[0].mxu0
        %v699 = vadd.f32 %v617, %v698
        %700 = vdwg.mxu0
        %v701 = vmul.f32 %v697, 0.2
        %v702 = vmul.f32 %v699, 0.2
        %v703 = vmax.f32 %v697, %v701
        %v704 = vmax.f32 %v699, %v702
        %v707 = vcombine.low %v703, %v704
        %709 = vst [vmem:[#allocation2 + $0x4] sm:$0xff] %v707
        %v710 = vld [vmem:[#allocation2] sm:$0xff]
        %v711 = vld [vmem:[#allocation2 + $0x8] sm:$0xf]
        %v712 = vld [vmem:[#allocation7] ss:$8 sm:$0x3]
        %vm713 = vcmp.gt.f32.partialorder %v712, 0.5
        %v714 = vsel %vm713, 1, 0
        %v715 = vlaneseq
        %v716 = vshrl.u32 %v715, 7
        %v717 = vsub.s32 0, %v716
        %v718 = vrot.slane %v714, %v717
        %v719 = vlaneseq
        %v720 = vshrl.u32 %v719, 7
        %v721 = vsub.s32 1, %v720
        %v722 = vrot.slane %v714, %v721
        %vm723 = vcmp.eq.s32.totalorder %v718, 1
        %vm724 = vcmp.eq.s32.totalorder %v722, 1
        %v727 = vcombine.high %v710, %v710
        %728 = vrot.lane.b32.xlu0 %v710, 17
        %v729 = vpop.permute.xlu0 %728
        %730 = vrot.lane.b32.xlu0 %v727, 17
        %v731 = vpop.permute.xlu0 %730
        %732 = vrot.lane.b32.xlu0 %v711, 17
        %v733 = vpop.permute.xlu0 %732
        %v734 = vsel %vm309, %v729, %v731
        %v735 = vsel %vm309, %v731, %v733
        %v738 = vsel %vm723, %v734, 0.0
        %v739 = vsel %vm724, %v735, 0.0
        %740 = vst [vmem:[#allocation3] sm:$0xf] %v738
        %741 = vst [vmem:[#allocation3 + $0x8] sm:$0xf] %v739
        %v742 = vld [vmem:[#allocation2] sm:$0xff]
        %v743 = vld [vmem:[#allocation2 + $0x8] sm:$0xf]
        %v744 = vld [vmem:[%s320] ss:$8 sm:$0x3]
        %vm745 = vcmp.gt.f32.partialorder %v744, 0.5
        %v746 = vsel %vm745, 1, 0
        %v747 = vlaneseq
        %v748 = vshrl.u32 %v747, 7
        %v749 = vsub.s32 0, %v748
        %v750 = vrot.slane %v746, %v749
        %v751 = vlaneseq
        %v752 = vshrl.u32 %v751, 7
        %v753 = vsub.s32 1, %v752
        %v754 = vrot.slane %v746, %v753
        %vm755 = vcmp.eq.s32.totalorder %v750, 1
        %vm756 = vcmp.eq.s32.totalorder %v754, 1
        %v759 = vcombine.high %v742, %v742
        %760 = vrot.lane.b32.xlu0 %v742, 16
        %v761 = vpop.permute.xlu0 %760
        %762 = vrot.lane.b32.xlu0 %v759, 16
        %v763 = vpop.permute.xlu0 %762
        %764 = vrot.lane.b32.xlu0 %v743, 16
        %v765 = vpop.permute.xlu0 %764
        %v766 = vsel %vm343, %v761, %v763
        %v767 = vsel %vm343, %v763, %v765
        %v770 = vsel %vm755, %v766, 0.0
        %v771 = vsel %vm756, %v767, 0.0
        %v774 = vrot.slane %v770, 4
        %v775 = vrot.slane %v771, 4
        %778 = vst [vmem:[#allocation3] sm:$0xf0] %v774
        %779 = vst [vmem:[#allocation3 + $0x8] sm:$0xf0] %v775
        %v780 = vld [vmem:[#allocation2] sm:$0xff]
        %v781 = vld [vmem:[#allocation2 + $0x8] sm:$0xf]
        %v782 = vld [vmem:[%s360] ss:$8 sm:$0x3]
        %vm783 = vcmp.gt.f32.partialorder %v782, 0.5
        %v784 = vsel %vm783, 1, 0
        %v785 = vlaneseq
        %v786 = vshrl.u32 %v785, 7
        %v787 = vsub.s32 0, %v786
        %v788 = vrot.slane %v784, %v787
        %v789 = vlaneseq
        %v790 = vshrl.u32 %v789, 7
        %v791 = vsub.s32 1, %v790
        %v792 = vrot.slane %v784, %v791
        %vm793 = vcmp.eq.s32.totalorder %v788, 1
        %vm794 = vcmp.eq.s32.totalorder %v792, 1
        %v797 = vcombine.high %v780, %v780
        %798 = vrot.lane.b32.xlu0 %v780, 15
        %v799 = vpop.permute.xlu0 %798
        %800 = vrot.lane.b32.xlu0 %v797, 15
        %v801 = vpop.permute.xlu0 %800
        %802 = vrot.lane.b32.xlu0 %v781, 15
        %v803 = vpop.permute.xlu0 %802
        %v804 = vsel %vm383, %v799, %v801
        %v805 = vsel %vm383, %v801, %v803
        %v808 = vsel %vm793, %v804, 0.0
        %v809 = vsel %vm794, %v805, 0.0
        %810 = vst [vmem:[#allocation3 + $0x10] sm:$0xf] %v808
        %811 = vst [vmem:[#allocation3 + $0x18] sm:$0xf] %v809
        %v812 = vld [vmem:[#allocation2] sm:$0xff]
        %v813 = vld [vmem:[#allocation2 + $0x8] sm:$0xf]
        %v814 = vld [vmem:[%s394] ss:$8 sm:$0x3]
        %vm815 = vcmp.gt.f32.partialorder %v814, 0.5
        %v816 = vsel %vm815, 1, 0
        %v817 = vlaneseq
        %v818 = vshrl.u32 %v817, 7
        %v819 = vsub.s32 0, %v818
        %v820 = vrot.slane %v816, %v819
        %v821 = vlaneseq
        %v822 = vshrl.u32 %v821, 7
        %v823 = vsub.s32 1, %v822
        %v824 = vrot.slane %v816, %v823
        %vm825 = vcmp.eq.s32.totalorder %v820, 1
        %vm826 = vcmp.eq.s32.totalorder %v824, 1
        %v829 = vcombine.high %v812, %v812
        %830 = vrot.lane.b32.xlu0 %v812, 1
        %v831 = vpop.permute.xlu0 %830
        %832 = vrot.lane.b32.xlu0 %v829, 1
        %v833 = vpop.permute.xlu0 %832
        %834 = vrot.lane.b32.xlu0 %v813, 1
        %v835 = vpop.permute.xlu0 %834
        %v836 = vsel %vm417, %v831, %v833
        %v837 = vsel %vm417, %v833, %v835
        %v840 = vsel %vm825, %v836, 0.0
        %v841 = vsel %vm826, %v837, 0.0
        %v844 = vrot.slane %v840, 4
        %v845 = vrot.slane %v841, 4
        %848 = vst [vmem:[#allocation3 + $0x10] sm:$0xf0] %v844
        %849 = vst [vmem:[#allocation3 + $0x18] sm:$0xf0] %v845
        %v850 = vld [vmem:[#allocation2 + $0x4] sm:$0xff]
        %v851 = vld [vmem:[%s433] ss:$8 sm:$0x3]
        %vm852 = vcmp.gt.f32.partialorder %v851, 0.5
        %v853 = vsel %vm852, 1, 0
        %v854 = vlaneseq
        %v855 = vshrl.u32 %v854, 7
        %v856 = vsub.s32 0, %v855
        %v857 = vrot.slane %v853, %v856
        %v858 = vlaneseq
        %v859 = vshrl.u32 %v858, 7
        %v860 = vsub.s32 1, %v859
        %v861 = vrot.slane %v853, %v860
        %vm862 = vcmp.eq.s32.totalorder %v857, 1
        %vm863 = vcmp.eq.s32.totalorder %v861, 1
        %v865 = vcombine.high %v850, %v850
        %v867 = vsel %vm862, %v850, 0.0
        %v868 = vsel %vm863, %v865, 0.0
        %869 = vst [vmem:[#allocation3 + $0x20] sm:$0xf] %v867
        %870 = vst [vmem:[#allocation3 + $0x28] sm:$0xf] %v868
        %v871 = vld [vmem:[#allocation2 + $0x4] sm:$0xff]
        %v872 = vld [vmem:[#allocation2 + $0xc] sm:$0xf]
        %v873 = vld [vmem:[%s456] ss:$8 sm:$0x3]
        %vm874 = vcmp.gt.f32.partialorder %v873, 0.5
        %v875 = vsel %vm874, 1, 0
        %v876 = vlaneseq
        %v877 = vshrl.u32 %v876, 7
        %v878 = vsub.s32 0, %v877
        %v879 = vrot.slane %v875, %v878
        %v880 = vlaneseq
        %v881 = vshrl.u32 %v880, 7
        %v882 = vsub.s32 1, %v881
        %v883 = vrot.slane %v875, %v882
        %vm884 = vcmp.eq.s32.totalorder %v879, 1
        %vm885 = vcmp.eq.s32.totalorder %v883, 1
        %v888 = vcombine.high %v871, %v871
        %889 = vrot.lane.b32.xlu0 %v871, 127
        %v890 = vpop.permute.xlu0 %889
        %891 = vrot.lane.b32.xlu0 %v888, 127
        %v892 = vpop.permute.xlu0 %891
        %893 = vrot.lane.b32.xlu0 %v872, 127
        %v894 = vpop.permute.xlu0 %893
        %v895 = vsel %vm479, %v890, %v892
        %v896 = vsel %vm479, %v892, %v894
        %v899 = vsel %vm884, %v895, 0.0
        %v900 = vsel %vm885, %v896, 0.0
        %v903 = vrot.slane %v899, 4
        %v904 = vrot.slane %v900, 4
        %907 = vst [vmem:[#allocation3 + $0x20] sm:$0xf0] %v903
        %908 = vst [vmem:[#allocation3 + $0x28] sm:$0xf0] %v904
        %v909 = vld [vmem:[#allocation2 + $0x4] sm:$0xff]
        %v910 = vld [vmem:[#allocation2 + $0xc] sm:$0xf]
        %v911 = vld [vmem:[%s496] ss:$8 sm:$0x3]
        %vm912 = vcmp.gt.f32.partialorder %v911, 0.5
        %v913 = vsel %vm912, 1, 0
        %v914 = vlaneseq
        %v915 = vshrl.u32 %v914, 7
        %v916 = vsub.s32 0, %v915
        %v917 = vrot.slane %v913, %v916
        %v918 = vlaneseq
        %v919 = vshrl.u32 %v918, 7
        %v920 = vsub.s32 1, %v919
        %v921 = vrot.slane %v913, %v920
        %vm922 = vcmp.eq.s32.totalorder %v917, 1
        %vm923 = vcmp.eq.s32.totalorder %v921, 1
        %v926 = vcombine.high %v909, %v909
        %927 = vrot.lane.b32.xlu0 %v909, 113
        %v928 = vpop.permute.xlu0 %927
        %929 = vrot.lane.b32.xlu0 %v926, 113
        %v930 = vpop.permute.xlu0 %929
        %931 = vrot.lane.b32.xlu0 %v910, 113
        %v932 = vpop.permute.xlu0 %931
        %v933 = vsel %vm519, %v928, %v930
        %v934 = vsel %vm519, %v930, %v932
        %v937 = vsel %vm922, %v933, 0.0
        %v938 = vsel %vm923, %v934, 0.0
        %939 = vst [vmem:[#allocation3 + $0x30] sm:$0xf] %v937
        %940 = vst [vmem:[#allocation3 + $0x38] sm:$0xf] %v938
        %v941 = vld [vmem:[#allocation2 + $0x4] sm:$0xff]
        %v942 = vld [vmem:[#allocation2 + $0xc] sm:$0xf]
        %v943 = vld [vmem:[%s530] ss:$8 sm:$0x3]
        %vm944 = vcmp.gt.f32.partialorder %v943, 0.5
        %v945 = vsel %vm944, 1, 0
        %v946 = vlaneseq
        %v947 = vshrl.u32 %v946, 7
        %v948 = vsub.s32 0, %v947
        %v949 = vrot.slane %v945, %v948
        %v950 = vlaneseq
        %v951 = vshrl.u32 %v950, 7
        %v952 = vsub.s32 1, %v951
        %v953 = vrot.slane %v945, %v952
        %vm954 = vcmp.eq.s32.totalorder %v949, 1
        %vm955 = vcmp.eq.s32.totalorder %v953, 1
        %v958 = vcombine.high %v941, %v941
        %959 = vrot.lane.b32.xlu0 %v941, 112
        %v960 = vpop.permute.xlu0 %959
        %961 = vrot.lane.b32.xlu0 %v958, 112
        %v962 = vpop.permute.xlu0 %961
        %963 = vrot.lane.b32.xlu0 %v942, 112
        %v964 = vpop.permute.xlu0 %963
        %v965 = vsel %vm553, %v960, %v962
        %v966 = vsel %vm553, %v962, %v964
        %v969 = vsel %vm954, %v965, 0.0
        %v970 = vsel %vm955, %v966, 0.0
        %v973 = vrot.slane %v969, 4
        %v974 = vrot.slane %v970, 4
        %977 = vst [vmem:[#allocation3 + $0x30] sm:$0xf0] %v973
        %978 = vst [vmem:[#allocation3 + $0x38] sm:$0xf0] %v974
        %v979 = vld [vmem:[#allocation2 + $0x4] sm:$0xff]
        %v980 = vld [vmem:[#allocation2 + $0xc] sm:$0xf]
        %v981 = vld [vmem:[%s570] ss:$8 sm:$0x3]
        %vm982 = vcmp.gt.f32.partialorder %v981, 0.5
        %v983 = vsel %vm982, 1, 0
        %v984 = vlaneseq
        %v985 = vshrl.u32 %v984, 7
        %v986 = vsub.s32 0, %v985
        %v987 = vrot.slane %v983, %v986
        %v988 = vlaneseq
        %v989 = vshrl.u32 %v988, 7
        %v990 = vsub.s32 1, %v989
        %v991 = vrot.slane %v983, %v990
        %vm992 = vcmp.eq.s32.totalorder %v987, 1
        %vm993 = vcmp.eq.s32.totalorder %v991, 1
        %v996 = vcombine.high %v979, %v979
        %997 = vrot.lane.b32.xlu0 %v979, 111
        %v998 = vpop.permute.xlu0 %997
        %999 = vrot.lane.b32.xlu0 %v996, 111
        %v1000 = vpop.permute.xlu0 %999
        %1001 = vrot.lane.b32.xlu0 %v980, 111
        %v1002 = vpop.permute.xlu0 %1001
        %v1003 = vsel %vm593, %v998, %v1000
        %v1004 = vsel %vm593, %v1000, %v1002
        %v1007 = vsel %vm992, %v1003, 0.0
        %v1008 = vsel %vm993, %v1004, 0.0
        %1009 = vst [vmem:[#allocation3 + $0x40] sm:$0xf] %v1007
        %1010 = vst [vmem:[#allocation3 + $0x48] sm:$0xf] %v1008
        %v1011 = vld [vmem:[%s4] sm:$0xf]
        %v1012 = vld [vmem:[#allocation3] sm:$0xff]
        %v1013 = vld [vmem:[#allocation3 + $0x8] sm:$0xff]
        %v1014 = vld [vmem:[#allocation3 + $0x10] sm:$0xff]
        %v1015 = vld [vmem:[#allocation3 + $0x18] sm:$0xff]
        %v1016 = vld [vmem:[#allocation3 + $0x20] sm:$0xff]
        %v1017 = vld [vmem:[#allocation3 + $0x28] sm:$0xff]
        %v1018 = vld [vmem:[#allocation3 + $0x30] sm:$0xff]
        %v1019 = vld [vmem:[#allocation3 + $0x38] sm:$0xff]
        %v1020 = vld [vmem:[#allocation3 + $0x40] sm:$0xf]
        %v1021 = vld [vmem:[#allocation3 + $0x48] sm:$0xf]
        %v1022 = vld [vmem:[%s5] sm:$0xf]
        %1024 = vset.pattern.permute.xlu0 0
        %1025 = vperm.xlu0 %1024, %v1022
        %v1026 = vpop.permute.xlu0 %1025
        %v1029 = vsel %vm619, %v1011, 0
        %v1032 = vsel %vm623, %v1020, 0
        %v1035 = vsel %vm623, %v1021, 0
        %1037 = vmatprep.subr.mxu0 %v1013
        %1038 = vmatpush1.msra.mxu0 %v1012
        %1039 = vmatprep.subr.mxu0 %v1015
        %1040 = vmatpush1.msra.mxu0 %v1014
        %1041 = vmatprep.subr.mxu0 %v1017
        %1042 = vmatpush1.msra.mxu0 %v1016
        %1043 = vmatprep.subr.mxu0 %v1019
        %1044 = vmatpush1.msra.mxu0 %v1018
        %1045 = vmatprep.subr.mxu0 %v1035
        %1046 = vmatpush1.msra.mxu0 %v1032
        %1047 = vmatprep.subr.mxu0 0.0
        %1048 = vmatpush1.msra.mxu0 0.0
        %1049 = vmatprep.subr.mxu0 0.0
        %1050 = vmatpush1.msra.mxu0 0.0
        %1051 = vmatprep.subr.mxu0 0.0
        %1052 = vmatpush1.msra.mxu0 0.0
        %1053 = vmatprep.subr.mxu0 0.0
        %1054 = vmatpush1.msra.mxu0 0.0
        %1055 = vmatprep.subr.mxu0 0.0
        %1056 = vmatpush1.msra.mxu0 0.0
        %1057 = vmatprep.subr.mxu0 0.0
        %1058 = vmatpush1.msra.mxu0 0.0
        %1059 = vmatprep.subr.mxu0 0.0
        %1060 = vmatpush1.msra.mxu0 0.0
        %1061 = vmatprep.subr.mxu0 0.0
        %1062 = vmatpush1.msra.mxu0 0.0
        %1063 = vmatprep.subr.mxu0 0.0
        %1064 = vmatpush1.msra.mxu0 0.0
        %1065 = vmatprep.subr.mxu0 0.0
        %1066 = vmatpush1.msra.mxu0 0.0
        %1067 = vmatprep.subr.mxu0 0.0
        %1068 = vmatpush1.msra.mxu0 0.0
        %1069 = vmatprep.subr.mxu0 0.0
        %1070 = vmatpush1.msra.mxu0 0.0
        %1071 = vmatprep.subr.mxu0 0.0
        %1072 = vmatpush1.msra.mxu0 0.0
        %1073 = vmatprep.subr.mxu0 0.0
        %1074 = vmatpush1.msra.mxu0 0.0
        %1075 = vmatprep.subr.mxu0 0.0
        %1076 = vmatpush1.msra.mxu0 0.0
        %1077 = vmatprep.subr.mxu0 0.0
        %1078 = vmatpush1.msra.mxu0 0.0
        %1079 = vmatprep.subr.mxu0 0.0
        %1080 = vmatpush1.msra.mxu0 0.0
        %1081 = vmatprep.subr.mxu0 0.0
        %1082 = vmatpush1.msra.mxu0 0.0
        %1083 = vmatprep.subr.mxu0 0.0
        %1084 = vmatpush1.msra.mxu0 0.0
        %1085 = vmatprep.subr.mxu0 0.0
        %1086 = vmatpush1.msra.mxu0 0.0
        %1087 = vmatprep.subr.mxu0 0.0
        %1088 = vmatpush1.msra.mxu0 0.0
        %1089 = vmatprep.subr.mxu0 0.0
        %1090 = vmatpush1.msra.mxu0 0.0
        %1091 = vmatprep.subr.mxu0 0.0
        %1092 = vmatpush1.msra.mxu0 0.0
        %1093 = vmatprep.subr.mxu0 0.0
        %1094 = vmatpush1.msra.mxu0 0.0
        %1095 = vmatprep.subr.mxu0 0.0
        %1096 = vmatpush1.msra.mxu0 0.0
        %1097 = vmatprep.subr.mxu0 0.0
        %1098 = vmatpush1.msra.mxu0 0.0
        %1099 = vmatprep.subr.mxu0 0.0
        %1100 = vmatpush1.msra.mxu0 0.0
        %1101 = vmatprep.mubr.f32.mxu0 0.0
        %1102 = vmatmul.mubr.f32.gmra.mrb[0].mxu0 %v1029
        %v1103 = vpop.f32.mrb[0].mxu0
        %v1104 = vadd.f32 %v1026, %v1103
        %v1105 = vpop.f32.mrb[0].mxu0
        %v1106 = vadd.f32 %v1026, %v1105
        %1107 = vdwg.mxu0
        %v1109 = vcombine.high %v283, %v283
        %v1111 = vadd.f32 %v1104, %v283
        %v1112 = vadd.f32 %v1106, %v1109
        %v1115 = vcombine.low %v1111, %v1112
        %1117 = vst [vmem:[%s282] sm:$0xff] %v1115
        %s1118 = sand.u32 %s163, 1
        %s1119 = scalar_lea.sflag [#allocation6], %s1118
        %s1120 = sand.u32 %s163, 1
        %s1121 = smul.addr %s1120, 8
        %s1122 = scalar_lea.vmem [#allocation9], %s1121
        // Predicated region
        $region53: #{tpu_custom_call.1} parent=43 // pred_check
          %p1123 = pneg %p173
        $region54: #{tpu_custom_call.1} parent=43 // pred_check_branch
          %1125 = sbr.rel (%p1123) target = $region56
        $region55: #{tpu_custom_call.1} parent=43 // pred_region
          %s1127 = ssub.s32 128, 128
          %1128 = vsyncadd %s1119, %s1127
          %s1129 = smul.addr %s24, 2
          %s1130 = smul.addr %s1129, 64
          %s1131 = scalar_lea.hbm %s6, %s1130
          %s1133 = sshll.u32 %s1122, 4
          %s1134 = int_to_ptr.vmem [resolvable:$true] %s1133
          %1136 = dma.vmem_to_hbm [thread:$0]  %s1134, 128, %s1131, %s1119
        $region56: #{tpu_custom_call.1} parent=43 // pred_fallthru
          _
      $region44: #{tpu_custom_call.1} parent=5 // pred_fallthru
        _
      %p1137 = scmp.le.s32.totalorder 2, %s19
      // Predicated region
      $region57: #{tpu_custom_call.1} parent=5 // pred_check
        %p1138 = pneg %p1137
      $region58: #{tpu_custom_call.1} parent=5 // pred_check_branch
        %1140 = sbr.rel (%p1138) target = $region60
      $region59: #{tpu_custom_call.1} parent=5 // pred_region
        %s1141 = ssub.s32 %s19, 2
        // Predicated region
        $region61: #{tpu_custom_call.1} parent=59 // pred_check
          %p1142 = pneg %p179
        $region62: #{tpu_custom_call.1} parent=59 // pred_check_branch
          %1144 = sbr.rel (%p1142) target = $region64
        $region63: #{tpu_custom_call.1} parent=59 // pred_region
          %s1145 = sand.u32 %s164, 1
          %s1146 = scalar_lea.sflag [#allocation6], %s1145
          %s1147 = sand.u32 %s164, 1
          %s1148 = smul.addr %s1147, 8
          %s1149 = scalar_lea.vmem [#allocation9], %s1148
          %1150 = dma.done %s1146, 128
        $region64: #{tpu_custom_call.1} parent=59 // pred_fallthru
          _
      $region60: #{tpu_custom_call.1} parent=5 // pred_fallthru
        _
    $region6: #{tpu_custom_call.1} parent=1 // loop_footer
      %s23 = sadd.s32 1, %s19
    $region7: #{tpu_custom_call.1} parent=1 // loop_footer_branch
      %18 = sbr.rel target = $region3
    $region8: #{tpu_custom_call.1} parent=1 // loop_exit
      _
    %1151 = vsyncpa [#allocation5], 1
    %s1152 = scalar_lea.sflag [#allocation5], 1
    %1153 = vsyncpa %s1152, 1
    %1154 = vsyncpa [#allocation8], 1
    %1155 = vsyncpa [#allocation6], 1
    %s1156 = scalar_lea.sflag [#allocation6], 1
    %1157 = vsyncpa %s1156, 1

</llo_original>
